<compile_context>
chip_gen: v6e
topology: v6e:2x2x1
jax: 0.10.0
libtpu: 0.0.40
codegen_flags: <defaults>
</compile_context>

<pallas_src>
import jax
import jax.numpy as jnp
from jax.experimental import pallas as pl
from jax.experimental.pallas import tpu as pltpu

C1 = 256    # conv1/conv2 output channels
C3 = 80     # conv3 output channels (logical)
C3P = 128   # conv3 output channels padded to a full lane tile
KW = 3      # kernel width of all convs
KH = 2      # kernel height of conv3 (= the I/Q axis)


def single_branch_kernel(x_ref, w1_ref, b1_ref, w2_ref, b2_ref, w3_ref, b3_ref,
                         out_ref):
    # x_ref block: (bt * wp, 2) f32  -- bt samples of padded width wp, width on
    #                                   sublanes, the 2-row I/Q axis on lanes.
    # out_ref block: (bt, 80, wp - 6) f32, channel-major per sample.
    n = x_ref.shape[0]                 # bt * wp
    bt, c3, wo3 = out_ref.shape
    wp = n // bt

    x = x_ref[...]                     # (n, 2) f32
    w1 = w1_ref[...]                   # (3, 256) f32
    b1 = b1_ref[...]                   # (1, 256) f32
    b2 = b2_ref[...]                   # (1, 256) f32
    b3 = b3_ref[...]                   # (1, 128) f32

    def shift(v, k):
        # shift(v, k)[i] == v[(i + k) % rows]  (static k, XLU sublane rotate).
        # Wrapped / cross-sample rows land only in the per-sample conv halo,
        # which is discarded at the output write.
        return v if k == 0 else pltpu.roll(v, v.shape[0] - k, axis=0)

    # ---- Conv2d(1, 256, (1,3)) + ReLU  (VPU broadcast; both H rows stacked on
    #      the sublane axis so downstream matmuls see 2n rows at once). ----------
    xst = jnp.concatenate([x[:, 0:1], x[:, 1:2]], axis=0)        # (2n, 1)
    acc = xst * w1[0:1, :]                                       # (2n, 256)
    for k in range(1, KW):
        acc = acc + shift(xst * w1[k:k + 1, :], k)
    y1 = jnp.maximum(acc + b1, 0.0)                              # (2n, 256) f32

    # ---- Conv2d(256, 256, (1,3)) + ReLU: 3 taps fused into one K=768 matmul. ---
    cat1 = jnp.concatenate([shift(y1, k) for k in range(KW)], axis=1)  # (2n, 768)
    y2 = jnp.dot(cat1.astype(jnp.bfloat16), w2_ref[...],
                 preferred_element_type=jnp.float32)
    y2 = jnp.maximum(y2 + b2, 0.0)                               # (2n, 256) f32

    # ---- Conv2d(256, 80, (2,3)) + ReLU: 6 (kh,kw) taps fused into one K=1536
    #      matmul; output channels padded to 128 for aligned MXU columns. --------
    shifted = [shift(y2, k) for k in range(KW)]                  # reused for both kh
    cat2 = jnp.concatenate(
        [s[h * n:(h + 1) * n, :] for h in range(KH) for s in shifted],
        axis=1)                                                  # (n, 1536)
    y3 = jnp.dot(cat2.astype(jnp.bfloat16), w3_ref[...],
                 preferred_element_type=jnp.float32)
    y3 = jnp.maximum(y3 + b3, 0.0)                               # (n, 128) f32

    # ---- Channel-major, lane-dense store: keep only the 80 real channels and the
    #      per-sample valid width (first wp-6 positions of each sample). ---------
    y3t = jnp.swapaxes(y3.reshape(bt, wp, y3.shape[1]), 1, 2)    # (bt, 128, wp)
    out_ref[...] = y3t[:, :c3, :wo3]


def single_branch_forward(x_nchw, params, *, block_batch=None):
    """x_nchw: (B, 1, 2, W) float32 (PyTorch layout).  Returns (B, 80*(W-6))."""
    w1, b1, w2cat, b2, w3cat, b3p = params
    B, cin, H, W = x_nchw.shape
    assert cin == 1 and H == 2 and W >= 7

    wo3 = W - 6
    wp = ((W + 7) // 8) * 8            # per-sample width, sublane aligned
    wo3p = wp - 6

    if block_batch is None:
        bt = max(1, 512 // wp)         # target ~512 MXU rows per grid step
        bt = min(bt, max(1, B // 2))   # keep >= 2 grid steps when B allows (v7x: 2 TCs)
    else:
        bt = block_batch
    bt = max(1, min(bt, B))
    nb = pl.cdiv(B, bt)
    bpad = nb * bt

    # (B,1,2,W) -> (B, W, 2); pad W->wp and B->bpad with zeros; flatten samples
    # onto the sublane axis so the kernel sees (bt*wp, 2) rows per grid step.
    x_k = jnp.transpose(x_nchw[:, 0, :, :], (0, 2, 1)).astype(jnp.float32)
    x_k = jnp.pad(x_k, ((0, bpad - B), (0, wp - W), (0, 0)))
    x_flat = x_k.reshape(bpad * wp, 2)

    out = pl.pallas_call(
        single_branch_kernel,
        out_shape=jax.ShapeDtypeStruct((bpad, C3, wo3p), jnp.float32),
        grid_spec=pltpu.PrefetchScalarGridSpec(
            num_scalar_prefetch=0,
            grid=(nb,),
            in_specs=[
                pl.BlockSpec((bt * wp, 2), lambda i: (i, 0)),
                pl.BlockSpec((KW, C1), lambda i: (0, 0)),
                pl.BlockSpec((1, C1), lambda i: (0, 0)),
                pl.BlockSpec((KW * C1, C1), lambda i: (0, 0)),
                pl.BlockSpec((1, C1), lambda i: (0, 0)),
                pl.BlockSpec((KH * KW * C1, C3P), lambda i: (0, 0)),
                pl.BlockSpec((1, C3P), lambda i: (0, 0)),
            ],
            out_specs=pl.BlockSpec((bt, C3, wo3p), lambda i: (i, 0, 0)),
        ),
        compiler_params=pltpu.CompilerParams(
            dimension_semantics=("parallel",),
            vmem_limit_bytes=48 * 1024 * 1024,
        ),
    )(x_flat, w1, b1, w2cat, b2, w3cat, b3p)

    # Drop batch/width padding (no-op when already aligned); channel-major flatten
    # matches torch's reshape(B, -1) on (B, 80, 1, W-6) and is a free reshape.
    out = out[:B, :, :wo3]
    return out.reshape(B, C3 * wo3)


def init_params(key):
    """Deterministic init.  Returns (kernel-layout params, torch-layout params)."""
    k1, k2, k3, k4, k5, k6 = jax.random.split(key, 6)
    # PyTorch OIHW weights
    w1_t = jax.random.normal(k1, (C1, 1, 1, KW), jnp.float32) * 0.1
    b1_t = jax.random.normal(k2, (C1,), jnp.float32) * 0.1
    w2_t = jax.random.normal(k3, (C1, C1, 1, KW), jnp.float32) * 0.05
    b2_t = jax.random.normal(k4, (C1,), jnp.float32) * 0.1
    w3_t = jax.random.normal(k5, (C3, C1, KH, KW), jnp.float32) * 0.05
    b3_t = jax.random.normal(k6, (C3,), jnp.float32) * 0.1

    # Kernel layouts:
    #   w1:    (co,1,1,kw)   -> (kw, co)                       f32 (VPU path)
    #   w2cat: (co,ci,1,kw)  -> rows (kw, ci) x cols co         bf16, (768, 256)
    #   w3cat: (co,ci,kh,kw) -> rows (kh, kw, ci) x cols co     bf16, (1536, 128) padded
    w1 = jnp.transpose(w1_t[:, 0, 0, :], (1, 0))
    w2cat = jnp.transpose(w2_t[:, :, 0, :], (2, 1, 0)).reshape(KW * C1, C1)
    w2cat = w2cat.astype(jnp.bfloat16)
    w3cat80 = jnp.transpose(w3_t, (2, 3, 1, 0)).reshape(KH * KW * C1, C3)
    w3cat = jnp.zeros((KH * KW * C1, C3P), jnp.float32).at[:, :C3].set(w3cat80)
    w3cat = w3cat.astype(jnp.bfloat16)
    b3p = jnp.zeros((1, C3P), jnp.float32).at[0, :C3].set(b3_t)

    kernel_params = (w1, b1_t.reshape(1, C1), w2cat, b2_t.reshape(1, C1),
                     w3cat, b3p)
    torch_params = (w1_t, b1_t, w2_t, b2_t, w3_t, b3_t)
    return kernel_params, torch_params


def reference_forward(x_nchw, torch_params):
    """Pure-JAX reference mirroring the PyTorch module (eval mode).

    conv1 is computed exactly in f32 (like the kernel's VPU path); conv2/conv3 use
    bf16 operands with f32 accumulation, exactly like the kernel's MXU path (and
    like XLA's default TPU precision for f32 convs)."""
    w1, b1, w2, b2, w3, b3 = torch_params
    B = x_nchw.shape[0]
    W = x_nchw.shape[3]
    wo1 = W - 2

    # Conv2d(1,256,(1,3)) + ReLU, exact f32 broadcast math (cin = 1).
    x2 = x_nchw[:, 0]                                   # (B, 2, W)
    w1r = w1[:, 0, 0, :]                                # (256, 3)
    y1 = sum(x2[:, None, :, k:k + wo1] * w1r[None, :, k, None, None]
             for k in range(KW))
    y1 = jnp.maximum(y1 + b1[None, :, None, None], 0.0)  # (B, 256, 2, W-2)

    dn = ("NCHW", "OIHW", "NCHW")

    def conv_bf16(v, w, b):
        o = jax.lax.conv_general_dilated(
            v.astype(jnp.bfloat16), w.astype(jnp.bfloat16), (1, 1), "VALID",
            dimension_numbers=dn, preferred_element_type=jnp.float32)
        return jnp.maximum(o + b[None, :, None, None], 0.0)

    y2 = conv_bf16(y1, w2, b2)                          # (B, 256, 2, W-4)
    y3 = conv_bf16(y2, w3, b3)                          # (B,  80, 1, W-6)
    return y3.reshape(B, -1)


if __name__ == "__main__":
    key = jax.random.PRNGKey(0)
    kp_key, x_key = jax.random.split(key)

    kernel_params, torch_params = init_params(kp_key)

    B, W = 4, 16                                        # small test shape
    x = jax.random.normal(x_key, (B, 1, 2, W), jnp.float32)

    out = jax.block_until_ready(single_branch_forward(x, kernel_params))
    ref = jax.block_until_ready(reference_forward(x, torch_params))

    assert out.shape == (B, C3 * (W - 6)), out.shape
    # bf16-operand / f32-accumulation math is mirrored in the reference; tolerance
    # only has to absorb accumulation-order differences.
    max_err = float(jnp.max(jnp.abs(out - ref)))
    assert jnp.allclose(out, ref, rtol=1e-3, atol=1e-3), max_err
    print("KERNEL_OK")
</pallas_src>

<mosaic_0001>
module attributes {stable_mosaic.version = 11 : i64} {
  func.func @single_branch_kernel(%arg0: i32, %arg1: memref<32x2xf32, #tpu.memory_space<vmem>>, %arg2: memref<3x256xf32, #tpu.memory_space<vmem>>, %arg3: memref<1x256xf32, #tpu.memory_space<vmem>>, %arg4: memref<768x256xbf16, #tpu.memory_space<vmem>>, %arg5: memref<1x256xf32, #tpu.memory_space<vmem>>, %arg6: memref<1536x128xbf16, #tpu.memory_space<vmem>>, %arg7: memref<1x128xf32, #tpu.memory_space<vmem>>, %arg8: memref<2x80x10xf32, #tpu.memory_space<vmem>>) attributes {dimension_semantics = [#tpu.dimension_semantics<parallel>], iteration_bounds = array<i64: 2>, scalar_prefetch = 0 : i64, scratch_operands = 0 : i64, tpu.core_type = #tpu.core_type<tc>, window_params = [{transform_indices = @transform_0, window_bounds = array<i64: 32, 2>}, {pipeline_mode = #tpu.pipeline_mode<synchronous>, transform_indices = @transform_1, window_bounds = array<i64: 3, 256>}, {pipeline_mode = #tpu.pipeline_mode<synchronous>, transform_indices = @transform_2, window_bounds = array<i64: 1, 256>}, {pipeline_mode = #tpu.pipeline_mode<synchronous>, transform_indices = @transform_3, window_bounds = array<i64: 768, 256>}, {pipeline_mode = #tpu.pipeline_mode<synchronous>, transform_indices = @transform_4, window_bounds = array<i64: 1, 256>}, {pipeline_mode = #tpu.pipeline_mode<synchronous>, transform_indices = @transform_5, window_bounds = array<i64: 1536, 128>}, {pipeline_mode = #tpu.pipeline_mode<synchronous>, transform_indices = @transform_6, window_bounds = array<i64: 1, 128>}, {transform_indices = @transform_7, window_bounds = array<i64: 2, 80, 10>}]} {
    %c0 = arith.constant 0 : index
    %c0_0 = arith.constant 0 : index
    %0 = vector.load %arg1[%c0, %c0_0] : memref<32x2xf32, #tpu.memory_space<vmem>>, vector<32x2xf32>
    %c0_1 = arith.constant 0 : index
    %c0_2 = arith.constant 0 : index
    %1 = vector.load %arg2[%c0_1, %c0_2] : memref<3x256xf32, #tpu.memory_space<vmem>>, vector<3x256xf32>
    %c0_3 = arith.constant 0 : index
    %c0_4 = arith.constant 0 : index
    %2 = vector.load %arg3[%c0_3, %c0_4] : memref<1x256xf32, #tpu.memory_space<vmem>>, vector<1x256xf32>
    %c0_5 = arith.constant 0 : index
    %c0_6 = arith.constant 0 : index
    %3 = vector.load %arg5[%c0_5, %c0_6] : memref<1x256xf32, #tpu.memory_space<vmem>>, vector<1x256xf32>
    %c0_7 = arith.constant 0 : index
    %c0_8 = arith.constant 0 : index
    %4 = vector.load %arg7[%c0_7, %c0_8] : memref<1x128xf32, #tpu.memory_space<vmem>>, vector<1x128xf32>
    %5 = vector.extract_strided_slice %0 {offsets = [0, 0], sizes = [32, 1], strides = [1, 1]} : vector<32x2xf32> to vector<32x1xf32>
    %6 = vector.extract_strided_slice %0 {offsets = [0, 1], sizes = [32, 1], strides = [1, 1]} : vector<32x2xf32> to vector<32x1xf32>
    %7 = tpu.concatenate %5, %6 in 0 : vector<32x1xf32>, vector<32x1xf32> -> vector<64x1xf32>
    %8 = vector.extract_strided_slice %1 {offsets = [0, 0], sizes = [1, 256], strides = [1, 1]} : vector<3x256xf32> to vector<1x256xf32>
    %9 = vector.broadcast %7 : vector<64x1xf32> to vector<64x256xf32>
    %10 = vector.broadcast %8 : vector<1x256xf32> to vector<64x256xf32>
    %11 = arith.mulf %9, %10 : vector<64x256xf32>
    %12 = vector.extract_strided_slice %1 {offsets = [1, 0], sizes = [1, 256], strides = [1, 1]} : vector<3x256xf32> to vector<1x256xf32>
    %13 = vector.broadcast %7 : vector<64x1xf32> to vector<64x256xf32>
    %14 = vector.broadcast %12 : vector<1x256xf32> to vector<64x256xf32>
    %15 = arith.mulf %13, %14 : vector<64x256xf32>
    %c63_i32 = arith.constant 63 : i32
    %16 = tpu.dynamic_rotate %15 by %c63_i32 dim 0 : vector<64x256xf32>, i32 -> vector<64x256xf32>
    %17 = arith.addf %11, %16 : vector<64x256xf32>
    %18 = vector.extract_strided_slice %1 {offsets = [2, 0], sizes = [1, 256], strides = [1, 1]} : vector<3x256xf32> to vector<1x256xf32>
    %19 = vector.broadcast %7 : vector<64x1xf32> to vector<64x256xf32>
    %20 = vector.broadcast %18 : vector<1x256xf32> to vector<64x256xf32>
    %21 = arith.mulf %19, %20 : vector<64x256xf32>
    %c62_i32 = arith.constant 62 : i32
    %22 = tpu.dynamic_rotate %21 by %c62_i32 dim 0 : vector<64x256xf32>, i32 -> vector<64x256xf32>
    %23 = arith.addf %17, %22 : vector<64x256xf32>
    %24 = vector.broadcast %2 : vector<1x256xf32> to vector<64x256xf32>
    %25 = arith.addf %23, %24 : vector<64x256xf32>
    %cst = arith.constant 0.000000e+00 : f32
    %26 = vector.broadcast %cst : f32 to vector<64x256xf32>
    %27 = arith.maximumf %25, %26 : vector<64x256xf32>
    %c63_i32_9 = arith.constant 63 : i32
    %28 = tpu.dynamic_rotate %27 by %c63_i32_9 dim 0 : vector<64x256xf32>, i32 -> vector<64x256xf32>
    %c62_i32_10 = arith.constant 62 : i32
    %29 = tpu.dynamic_rotate %27 by %c62_i32_10 dim 0 : vector<64x256xf32>, i32 -> vector<64x256xf32>
    %30 = tpu.concatenate %27, %28, %29 in 1 : vector<64x256xf32>, vector<64x256xf32>, vector<64x256xf32> -> vector<64x768xf32>
    %31 = arith.truncf %30 : vector<64x768xf32> to vector<64x768xbf16>
    %c0_11 = arith.constant 0 : index
    %c0_12 = arith.constant 0 : index
    %32 = vector.load %arg4[%c0_11, %c0_12] : memref<768x256xbf16, #tpu.memory_space<vmem>>, vector<768x256xbf16>
    %cst_13 = arith.constant dense<0.000000e+00> : vector<64x256xf32>
    %33 = tpu.matmul %31, %32, %cst_13 {dimension_numbers = #tpu.dot_dimension_numbers<[1], [0], [0], [1], [0, 0, 1, 1], [], []>} : vector<64x768xbf16>, vector<768x256xbf16>, vector<64x256xf32> -> vector<64x256xf32>
    %34 = vector.broadcast %3 : vector<1x256xf32> to vector<64x256xf32>
    %35 = arith.addf %33, %34 : vector<64x256xf32>
    %cst_14 = arith.constant 0.000000e+00 : f32
    %36 = vector.broadcast %cst_14 : f32 to vector<64x256xf32>
    %37 = arith.maximumf %35, %36 : vector<64x256xf32>
    %c63_i32_15 = arith.constant 63 : i32
    %38 = tpu.dynamic_rotate %37 by %c63_i32_15 dim 0 : vector<64x256xf32>, i32 -> vector<64x256xf32>
    %c62_i32_16 = arith.constant 62 : i32
    %39 = tpu.dynamic_rotate %37 by %c62_i32_16 dim 0 : vector<64x256xf32>, i32 -> vector<64x256xf32>
    %40 = vector.extract_strided_slice %37 {offsets = [0, 0], sizes = [32, 256], strides = [1, 1]} : vector<64x256xf32> to vector<32x256xf32>
    %41 = vector.extract_strided_slice %38 {offsets = [0, 0], sizes = [32, 256], strides = [1, 1]} : vector<64x256xf32> to vector<32x256xf32>
    %42 = vector.extract_strided_slice %39 {offsets = [0, 0], sizes = [32, 256], strides = [1, 1]} : vector<64x256xf32> to vector<32x256xf32>
    %43 = vector.extract_strided_slice %37 {offsets = [32, 0], sizes = [32, 256], strides = [1, 1]} : vector<64x256xf32> to vector<32x256xf32>
    %44 = vector.extract_strided_slice %38 {offsets = [32, 0], sizes = [32, 256], strides = [1, 1]} : vector<64x256xf32> to vector<32x256xf32>
    %45 = vector.extract_strided_slice %39 {offsets = [32, 0], sizes = [32, 256], strides = [1, 1]} : vector<64x256xf32> to vector<32x256xf32>
    %46 = tpu.concatenate %40, %41, %42, %43, %44, %45 in 1 : vector<32x256xf32>, vector<32x256xf32>, vector<32x256xf32>, vector<32x256xf32>, vector<32x256xf32>, vector<32x256xf32> -> vector<32x1536xf32>
    %47 = arith.truncf %46 : vector<32x1536xf32> to vector<32x1536xbf16>
    %c0_17 = arith.constant 0 : index
    %c0_18 = arith.constant 0 : index
    %48 = vector.load %arg6[%c0_17, %c0_18] : memref<1536x128xbf16, #tpu.memory_space<vmem>>, vector<1536x128xbf16>
    %cst_19 = arith.constant dense<0.000000e+00> : vector<32x128xf32>
    %49 = tpu.matmul %47, %48, %cst_19 {dimension_numbers = #tpu.dot_dimension_numbers<[1], [0], [0], [1], [0, 0, 1, 1], [], []>} : vector<32x1536xbf16>, vector<1536x128xbf16>, vector<32x128xf32> -> vector<32x128xf32>
    %50 = vector.broadcast %4 : vector<1x128xf32> to vector<32x128xf32>
    %51 = arith.addf %49, %50 : vector<32x128xf32>
    %cst_20 = arith.constant 0.000000e+00 : f32
    %52 = vector.broadcast %cst_20 : f32 to vector<32x128xf32>
    %53 = arith.maximumf %51, %52 : vector<32x128xf32>
    %54 = vector.shape_cast %53 : vector<32x128xf32> to vector<2x16x128xf32>
    %55 = tpu.transpose %54, [0, 2, 1] : vector<2x16x128xf32> -> vector<2x128x16xf32>
    %56 = vector.extract_strided_slice %55 {offsets = [0, 0, 0], sizes = [2, 80, 10], strides = [1, 1, 1]} : vector<2x128x16xf32> to vector<2x80x10xf32>
    %c0_21 = arith.constant 0 : index
    %c0_22 = arith.constant 0 : index
    %c0_23 = arith.constant 0 : index
    %57 = vector.load %arg8[%c0_21, %c0_22, %c0_23] : memref<2x80x10xf32, #tpu.memory_space<vmem>>, vector<2x80x10xf32>
    tpu.vector_store %arg8[%c0_21, %c0_22, %c0_23], %56 {strides = array<i32>} : memref<2x80x10xf32, #tpu.memory_space<vmem>>, vector<2x80x10xf32>,
    return
  }
  func.func @transform_0(%arg0: i32) -> (i32, i32) {
    %c0_i32 = arith.constant 0 : i32
    %c0_i32_0 = arith.constant 0 : i32
    return %arg0, %c0_i32 : i32, i32
  }
  func.func @transform_1(%arg0: i32) -> (i32, i32) {
    %c0_i32 = arith.constant 0 : i32
    %c0_i32_0 = arith.constant 0 : i32
    %c0_i32_1 = arith.constant 0 : i32
    return %c0_i32, %c0_i32_0 : i32, i32
  }
  func.func @transform_2(%arg0: i32) -> (i32, i32) {
    %c0_i32 = arith.constant 0 : i32
    %c0_i32_0 = arith.constant 0 : i32
    %c0_i32_1 = arith.constant 0 : i32
    return %c0_i32, %c0_i32_0 : i32, i32
  }
  func.func @transform_3(%arg0: i32) -> (i32, i32) {
    %c0_i32 = arith.constant 0 : i32
    %c0_i32_0 = arith.constant 0 : i32
    %c0_i32_1 = arith.constant 0 : i32
    return %c0_i32, %c0_i32_0 : i32, i32
  }
  func.func @transform_4(%arg0: i32) -> (i32, i32) {
    %c0_i32 = arith.constant 0 : i32
    %c0_i32_0 = arith.constant 0 : i32
    %c0_i32_1 = arith.constant 0 : i32
    return %c0_i32, %c0_i32_0 : i32, i32
  }
  func.func @transform_5(%arg0: i32) -> (i32, i32) {
    %c0_i32 = arith.constant 0 : i32
    %c0_i32_0 = arith.constant 0 : i32
    %c0_i32_1 = arith.constant 0 : i32
    return %c0_i32, %c0_i32_0 : i32, i32
  }
  func.func @transform_6(%arg0: i32) -> (i32, i32) {
    %c0_i32 = arith.constant 0 : i32
    %c0_i32_0 = arith.constant 0 : i32
    %c0_i32_1 = arith.constant 0 : i32
    return %c0_i32, %c0_i32_0 : i32, i32
  }
  func.func @transform_7(%arg0: i32) -> (i32, i32, i32) {
    %c0_i32 = arith.constant 0 : i32
    %c0_i32_0 = arith.constant 0 : i32
    %c0_i32_1 = arith.constant 0 : i32
    return %arg0, %c0_i32, %c0_i32_0 : i32, i32, i32
  }
}

</mosaic_0001>

<llo_original>
// kernel: tpu_custom_call.1
$region0: #{tpu_custom_call.1}
  #allocation0 [shape = 'u32[]', space=smem, size = 0x4, offset = 0x4, fixed_abs, tag = 'smem constant byte address 0x4 - core index']
  #allocation1 [shape = 'u32[144,128]{1,0:T(1,128)}', space=vmem, size = 0x12000, scoped, tag = 'internal scratch']
  %s0 = inlined_call_operand.vmem [shape: f32[64,2], index: 0, kind: input, shape index: {}]
  %s1 = inlined_call_operand.vmem [shape: f32[3,256], index: 1, kind: input, shape index: {}]
  %s2 = inlined_call_operand.vmem [shape: f32[1,256], index: 2, kind: input, shape index: {}]
  %s3 = inlined_call_operand.hbm [shape: bf16[768,256], index: 3, kind: input, shape index: {}]
  %s4 = inlined_call_operand.vmem [shape: f32[1,256], index: 4, kind: input, shape index: {}]
  %s5 = inlined_call_operand.hbm [shape: bf16[1536,128], index: 5, kind: input, shape index: {}]
  %s6 = inlined_call_operand.vmem [shape: f32[1,128], index: 6, kind: input, shape index: {}]
  %s7 = inlined_call_operand.vmem [shape: f32[4,80,10], index: 7, kind: output, shape index: {}]
  %s8 = sld [smem:[#allocation0]]
  $region69: #{tpu_custom_call.1} parent=0
    _
  %s10 = ssub.s32 1, %s8
  %s11 = scalar_select 0, %s10, %s8
  $region1: #{tpu_custom_call.1} parent=0
    #allocation2 [shape = 'u8[393216]{0}', space=vmem, size = 0x60000, scoped, tag = 'input window, operand 3, single buffered']
    #allocation3 [shape = 's32[2]{0}', space=sflag, size = 0x8, scoped, tag = 'scoped memory for tpu_custom_call.1']
    #allocation4 [shape = 'u8[393216]{0}', space=vmem, size = 0x60000, scoped, tag = 'input window, operand 5, single buffered']
    #allocation5 [shape = 's32[1]{0}', space=sflag, size = 0x4, scoped, tag = 'scoped memory for tpu_custom_call.1']
    %12 = vsyncpa [#allocation3], 0
    %13 = vsyncpa [#allocation5], 0
    loop: start=0, step=1, limit=4
    $region2: #{tpu_custom_call.1} parent=1 // loop_pre_header
      _
    $region3: #{tpu_custom_call.1} parent=1 // loop_header
      %s15 = sphi 0, %s19
      %p16 = scmp.ge.s32.totalorder %s15, 4
      %s25 = sphi 0, %s27
      %s28 = sphi 0, %s25
      %s29 = sphi 0, %s28
      %s45 = sphi 0, %s29
      %s49 = sphi 0, %s49
      %s51 = sphi 0, %s49
      %s52 = sphi 0, %s51
      %s66 = sphi 0, %s52
      %s70 = sphi 0, %s70
      %s72 = sphi 0, %s70
      %s73 = sphi 0, %s72
      %s87 = sphi 0, %s73
      %s91 = sphi 0, %s91
      %s93 = sphi 0, %s91
      %s94 = sphi 0, %s93
      %s108 = sphi 0, %s94
      %s112 = sphi 0, %s112
      %s114 = sphi 0, %s112
      %s115 = sphi 0, %s114
      %s129 = sphi 0, %s115
      %s133 = sphi 0, %s133
      %s135 = sphi 0, %s133
      %s136 = sphi 0, %s135
      %s150 = sphi 0, %s136
      %s154 = sphi 0, %s154
      %s156 = sphi 0, %s154
      %s157 = sphi 0, %s156
      %s171 = sphi 0, %s157
      %s177 = sphi 0, %s179
      %s180 = sphi 0, %s177
      %s181 = sphi 0, %s180
      %s197 = sphi 0, %s181
    $region4: #{tpu_custom_call.1} parent=1 // loop_header_branch
      %18 = sbr.rel (%p16) target = $region8
    $region5: #{tpu_custom_call.1} parent=1 // loop_body
      %s20 = ssub.s32 %s15, 1
      %s21 = ssub.s32 %s15, 2
      %s22 = sadd.s32 %s15, 1
      %s23 = ssub.s32 %s15, %s22
      %p24 = scmp.eq.s32.totalorder %s23, 0
      %s26 = sadd.s32 %s25, 1
      %s27 = scalar_select %p24, %s25, %s26
      %p30 = pneg %p24
      %p31 = scmp.eq.s32.totalorder %s15, 1
      %p32 = por %p30, %p31
      %p33 = scmp.ne.s32.totalorder %s25, %s28
      %p34 = scmp.eq.s32.totalorder %s15, 0
      %p35 = por %p33, %p34
      %p36 = scmp.ne.s32.totalorder %s25, %s28
      %p37 = scmp.eq.s32.totalorder %s20, 1
      %p38 = por %p36, %p37
      %p39 = scmp.ne.s32.totalorder %s28, %s29
      %p40 = scmp.eq.s32.totalorder %s20, 0
      %p41 = por %p39, %p40
      %p42 = scmp.ne.s32.totalorder %s28, %s29
      %p43 = scmp.eq.s32.totalorder %s21, 1
      %p44 = por %p42, %p43
      %p46 = scmp.ne.s32.totalorder %s29, %s45
      %p47 = scmp.eq.s32.totalorder %s21, 0
      %p48 = por %p46, %p47
      %s50 = sadd.s32 %s49, 1
      %p53 = scmp.eq.s32.totalorder %s15, 1
      %p54 = scmp.ne.s32.totalorder %s49, %s51
      %p55 = scmp.eq.s32.totalorder %s15, 0
      %p56 = por %p54, %p55
      %p57 = scmp.ne.s32.totalorder %s49, %s51
      %p58 = scmp.eq.s32.totalorder %s20, 1
      %p59 = por %p57, %p58
      %p60 = scmp.ne.s32.totalorder %s51, %s52
      %p61 = scmp.eq.s32.totalorder %s20, 0
      %p62 = por %p60, %p61
      %p63 = scmp.ne.s32.totalorder %s51, %s52
      %p64 = scmp.eq.s32.totalorder %s21, 1
      %p65 = por %p63, %p64
      %p67 = scmp.ne.s32.totalorder %s52, %s66
      %p68 = scmp.eq.s32.totalorder %s21, 0
      %p69 = por %p67, %p68
      %s71 = sadd.s32 %s70, 1
      %p74 = scmp.eq.s32.totalorder %s15, 1
      %p75 = scmp.ne.s32.totalorder %s70, %s72
      %p76 = scmp.eq.s32.totalorder %s15, 0
      %p77 = por %p75, %p76
      %p78 = scmp.ne.s32.totalorder %s70, %s72
      %p79 = scmp.eq.s32.totalorder %s20, 1
      %p80 = por %p78, %p79
      %p81 = scmp.ne.s32.totalorder %s72, %s73
      %p82 = scmp.eq.s32.totalorder %s20, 0
      %p83 = por %p81, %p82
      %p84 = scmp.ne.s32.totalorder %s72, %s73
      %p85 = scmp.eq.s32.totalorder %s21, 1
      %p86 = por %p84, %p85
      %p88 = scmp.ne.s32.totalorder %s73, %s87
      %p89 = scmp.eq.s32.totalorder %s21, 0
      %p90 = por %p88, %p89
      %s92 = sadd.s32 %s91, 1
      %p95 = scmp.eq.s32.totalorder %s15, 1
      %p96 = scmp.ne.s32.totalorder %s91, %s93
      %p97 = scmp.eq.s32.totalorder %s15, 0
      %p98 = por %p96, %p97
      %p99 = scmp.ne.s32.totalorder %s91, %s93
      %p100 = scmp.eq.s32.totalorder %s20, 1
      %p101 = por %p99, %p100
      %p102 = scmp.ne.s32.totalorder %s93, %s94
      %p103 = scmp.eq.s32.totalorder %s20, 0
      %p104 = por %p102, %p103
      %p105 = scmp.ne.s32.totalorder %s93, %s94
      %p106 = scmp.eq.s32.totalorder %s21, 1
      %p107 = por %p105, %p106
      %p109 = scmp.ne.s32.totalorder %s94, %s108
      %p110 = scmp.eq.s32.totalorder %s21, 0
      %p111 = por %p109, %p110
      %s113 = sadd.s32 %s112, 1
      %p116 = scmp.eq.s32.totalorder %s15, 1
      %p117 = scmp.ne.s32.totalorder %s112, %s114
      %p118 = scmp.eq.s32.totalorder %s15, 0
      %p119 = por %p117, %p118
      %p120 = scmp.ne.s32.totalorder %s112, %s114
      %p121 = scmp.eq.s32.totalorder %s20, 1
      %p122 = por %p120, %p121
      %p123 = scmp.ne.s32.totalorder %s114, %s115
      %p124 = scmp.eq.s32.totalorder %s20, 0
      %p125 = por %p123, %p124
      %p126 = scmp.ne.s32.totalorder %s114, %s115
      %p127 = scmp.eq.s32.totalorder %s21, 1
      %p128 = por %p126, %p127
      %p130 = scmp.ne.s32.totalorder %s115, %s129
      %p131 = scmp.eq.s32.totalorder %s21, 0
      %p132 = por %p130, %p131
      %s134 = sadd.s32 %s133, 1
      %p137 = scmp.eq.s32.totalorder %s15, 1
      %p138 = scmp.ne.s32.totalorder %s133, %s135
      %p139 = scmp.eq.s32.totalorder %s15, 0
      %p140 = por %p138, %p139
      %p141 = scmp.ne.s32.totalorder %s133, %s135
      %p142 = scmp.eq.s32.totalorder %s20, 1
      %p143 = por %p141, %p142
      %p144 = scmp.ne.s32.totalorder %s135, %s136
      %p145 = scmp.eq.s32.totalorder %s20, 0
      %p146 = por %p144, %p145
      %p147 = scmp.ne.s32.totalorder %s135, %s136
      %p148 = scmp.eq.s32.totalorder %s21, 1
      %p149 = por %p147, %p148
      %p151 = scmp.ne.s32.totalorder %s136, %s150
      %p152 = scmp.eq.s32.totalorder %s21, 0
      %p153 = por %p151, %p152
      %s155 = sadd.s32 %s154, 1
      %p158 = scmp.eq.s32.totalorder %s15, 1
      %p159 = scmp.ne.s32.totalorder %s154, %s156
      %p160 = scmp.eq.s32.totalorder %s15, 0
      %p161 = por %p159, %p160
      %p162 = scmp.ne.s32.totalorder %s154, %s156
      %p163 = scmp.eq.s32.totalorder %s20, 1
      %p164 = por %p162, %p163
      %p165 = scmp.ne.s32.totalorder %s156, %s157
      %p166 = scmp.eq.s32.totalorder %s20, 0
      %p167 = por %p165, %p166
      %p168 = scmp.ne.s32.totalorder %s156, %s157
      %p169 = scmp.eq.s32.totalorder %s21, 1
      %p170 = por %p168, %p169
      %p172 = scmp.ne.s32.totalorder %s157, %s171
      %p173 = scmp.eq.s32.totalorder %s21, 0
      %p174 = por %p172, %p173
      %s175 = ssub.s32 %s15, %s22
      %p176 = scmp.eq.s32.totalorder %s175, 0
      %s178 = sadd.s32 %s177, 1
      %s179 = scalar_select %p176, %s177, %s178
      %p182 = pneg %p176
      %p183 = scmp.eq.s32.totalorder %s15, 1
      %p184 = por %p182, %p183
      %p185 = scmp.ne.s32.totalorder %s177, %s180
      %p186 = scmp.eq.s32.totalorder %s15, 0
      %p187 = por %p185, %p186
      %p188 = scmp.ne.s32.totalorder %s177, %s180
      %p189 = scmp.eq.s32.totalorder %s20, 1
      %p190 = por %p188, %p189
      %p191 = scmp.ne.s32.totalorder %s180, %s181
      %p192 = scmp.eq.s32.totalorder %s20, 0
      %p193 = por %p191, %p192
      %p194 = scmp.ne.s32.totalorder %s180, %s181
      %p195 = scmp.eq.s32.totalorder %s21, 1
      %p196 = por %p194, %p195
      %p198 = scmp.ne.s32.totalorder %s181, %s197
      %p199 = scmp.eq.s32.totalorder %s21, 0
      %p200 = por %p198, %p199
      %p201 = scmp.le.s32.totalorder 1, %s15
      %p202 = scmp.lt.s32.totalorder %s15, 3
      %p203 = pnand %p201, %p202
      %p204 = pneg %p203
      // Predicated region
      $region9: #{tpu_custom_call.1} parent=5 // pred_check
        _
      $region10: #{tpu_custom_call.1} parent=5 // pred_check_branch
        %206 = sbr.rel (%p203) target = $region12
      $region11: #{tpu_custom_call.1} parent=5 // pred_region
        %s207 = ssub.s32 %s15, 1
        // Predicated region
        $region13: #{tpu_custom_call.1} parent=11 // pred_check
          %p208 = pneg %p62
        $region14: #{tpu_custom_call.1} parent=11 // pred_check_branch
          %210 = sbr.rel (%p208) target = $region16
        $region15: #{tpu_custom_call.1} parent=11 // pred_region
          _
        $region16: #{tpu_custom_call.1} parent=11 // pred_fallthru
          _
        // Predicated region
        $region17: #{tpu_custom_call.1} parent=11 // pred_check
          %p211 = pneg %p83
        $region18: #{tpu_custom_call.1} parent=11 // pred_check_branch
          %213 = sbr.rel (%p211) target = $region20
        $region19: #{tpu_custom_call.1} parent=11 // pred_region
          _
        $region20: #{tpu_custom_call.1} parent=11 // pred_fallthru
          _
        // Predicated region
        $region21: #{tpu_custom_call.1} parent=11 // pred_check
          %p214 = pneg %p104
        $region22: #{tpu_custom_call.1} parent=11 // pred_check_branch
          %216 = sbr.rel (%p214) target = $region24
        $region23: #{tpu_custom_call.1} parent=11 // pred_region
          %s218 = ssub.s32 12288, 12288
          %219 = vsyncadd [#allocation3], %s218
          %s220 = sshll.u32 [#allocation2], 4
          %s221 = int_to_ptr.vmem [resolvable:$true] %s220
          %226 = dma.hbm_to_vmem [thread:$0]  %s3, 12288, %s221, [#allocation3], 128, 128, 8
        $region24: #{tpu_custom_call.1} parent=11 // pred_fallthru
          _
        // Predicated region
        $region25: #{tpu_custom_call.1} parent=11 // pred_check
          %p227 = pneg %p125
        $region26: #{tpu_custom_call.1} parent=11 // pred_check_branch
          %229 = sbr.rel (%p227) target = $region28
        $region27: #{tpu_custom_call.1} parent=11 // pred_region
          _
        $region28: #{tpu_custom_call.1} parent=11 // pred_fallthru
          _
        // Predicated region
        $region29: #{tpu_custom_call.1} parent=11 // pred_check
          %p230 = pneg %p146
        $region30: #{tpu_custom_call.1} parent=11 // pred_check_branch
          %232 = sbr.rel (%p230) target = $region32
        $region31: #{tpu_custom_call.1} parent=11 // pred_region
          %s234 = ssub.s32 12288, 12288
          %235 = vsyncadd [#allocation5], %s234
          %s236 = sshll.u32 [#allocation4], 4
          %s237 = int_to_ptr.vmem [resolvable:$true] %s236
          %242 = dma.hbm_to_vmem [thread:$0]  %s5, 12288, %s237, [#allocation5], 64, 64, 4
        $region32: #{tpu_custom_call.1} parent=11 // pred_fallthru
          _
        // Predicated region
        $region33: #{tpu_custom_call.1} parent=11 // pred_check
          %p243 = pneg %p167
        $region34: #{tpu_custom_call.1} parent=11 // pred_check_branch
          %245 = sbr.rel (%p243) target = $region36
        $region35: #{tpu_custom_call.1} parent=11 // pred_region
          _
        $region36: #{tpu_custom_call.1} parent=11 // pred_fallthru
          _
      $region12: #{tpu_custom_call.1} parent=5 // pred_fallthru
        _
      %p246 = scmp.lt.s32.totalorder %s15, 2
      // Predicated region
      $region37: #{tpu_custom_call.1} parent=5 // pred_check
        %p247 = pneg %p246
      $region38: #{tpu_custom_call.1} parent=5 // pred_check_branch
        %249 = sbr.rel (%p247) target = $region40
      $region39: #{tpu_custom_call.1} parent=5 // pred_region
        // Predicated region
        $region41: #{tpu_custom_call.1} parent=39 // pred_check
          %p250 = pneg %p35
        $region42: #{tpu_custom_call.1} parent=39 // pred_check_branch
          %252 = sbr.rel (%p250) target = $region44
        $region43: #{tpu_custom_call.1} parent=39 // pred_region
          %s253 = smul.u32 4, %s15
          %p254 = scmp.lt.s32.totalorder %s253, 7
          %s255 = scalar_select %p254, %s253, 7
          %s256 = smul.addr %s255, 8
          %s257 = scalar_lea.vmem %s0, %s256
          %s258 = smul.u32 4, %s15
        $region44: #{tpu_custom_call.1} parent=39 // pred_fallthru
          _
      $region40: #{tpu_custom_call.1} parent=5 // pred_fallthru
        _
      %p259 = scmp.le.s32.totalorder 1, %s15
      %p260 = scmp.lt.s32.totalorder %s15, 3
      %p261 = pnand %p259, %p260
      %p262 = pneg %p261
      // Predicated region
      $region45: #{tpu_custom_call.1} parent=5 // pred_check
        _
      $region46: #{tpu_custom_call.1} parent=5 // pred_check_branch
        %264 = sbr.rel (%p261) target = $region48
      $region47: #{tpu_custom_call.1} parent=5 // pred_region
        %s265 = ssub.s32 %s15, 1
        // Predicated region
        $region49: #{tpu_custom_call.1} parent=47 // pred_check
          %p266 = pneg %p104
        $region50: #{tpu_custom_call.1} parent=47 // pred_check_branch
          %268 = sbr.rel (%p266) target = $region52
        $region51: #{tpu_custom_call.1} parent=47 // pred_region
          %269 = dma.done [#allocation3], 12288
        $region52: #{tpu_custom_call.1} parent=47 // pred_fallthru
          _
        // Predicated region
        $region53: #{tpu_custom_call.1} parent=47 // pred_check
          %p270 = pneg %p146
        $region54: #{tpu_custom_call.1} parent=47 // pred_check_branch
          %272 = sbr.rel (%p270) target = $region56
        $region55: #{tpu_custom_call.1} parent=47 // pred_region
          %273 = dma.done [#allocation5], 12288
        $region56: #{tpu_custom_call.1} parent=47 // pred_fallthru
          _
        %s274 = smul.u32 4, %s20
        %p275 = scmp.lt.s32.totalorder %s274, 7
        %s276 = scalar_select %p275, %s274, 7
        %s277 = smul.addr %s276, 8
        %s278 = scalar_lea.vmem %s0, %s277
        %p279 = pneg %p41
        %p280 = pneg %p38
        %p281 = pneg %p62
        %p282 = pneg %p59
        %p283 = pneg %p83
        %p284 = pneg %p80
        %p285 = pneg %p104
        %p286 = pneg %p101
        %p287 = pneg %p125
        %p288 = pneg %p122
        %p289 = pneg %p146
        %p290 = pneg %p143
        %p291 = pneg %p167
        %p292 = pneg %p164
        %p293 = pneg %p193
        %p294 = pneg %p190
        %s295 = smul.u32 2, %s20
        %p296 = scmp.lt.s32.totalorder %s295, 3
        %s297 = scalar_select %p296, %s295, 3
        %s298 = smul.addr %s297, 10
        %s299 = smul.addr %s298, 8
        %s300 = scalar_lea.vmem %s7, %s299
        %s301 = smul.u32 4, %s20
        %p302 = scmp.lt.s32.totalorder %s301, 7
        %s303 = scalar_select %p302, %s301, 7
        %s304 = smul.addr %s303, 8
        %s305 = scalar_lea.vmem %s0, %s304
        %s306 = smul.u32 4, %s20
        %s307 = smul.u32 2, %s20
        %p308 = scmp.lt.s32.totalorder %s307, 3
        %s309 = scalar_select %p308, %s307, 3
        %s310 = smul.addr %s309, 10
        %s311 = smul.addr %s310, 8
        %s312 = scalar_lea.vmem %s7, %s311
        %s313 = smul.u32 2, %s20
        %v315 = vld [vmem:[%s305] sm:$0xff]
        %v316 = vld [vmem:[%s305 + $0x8] sm:$0xff]
        %v317 = vld [vmem:[%s305 + $0x10] sm:$0xff]
        %v318 = vld [vmem:[%s305 + $0x18] sm:$0xff]
        %v319 = vld [vmem:[%s1] sm:$0x77]
        %v320 = vld [vmem:[%s2] sm:$0x3]
        %v321 = vld [vmem:[%s4] sm:$0x3]
        %v322 = vld [vmem:[%s6] sm:$0x1]
        %327 = vrot.lane.b32.xlu0 %v315, 127
        %v328 = vpop.permute.xlu0 %327
        %329 = vrot.lane.b32.xlu0 %v316, 127
        %v330 = vpop.permute.xlu0 %329
        %331 = vrot.lane.b32.xlu0 %v317, 127
        %v332 = vpop.permute.xlu0 %331
        %333 = vrot.lane.b32.xlu0 %v318, 127
        %v334 = vpop.permute.xlu0 %333
        %335 = vset.pattern.permute.xlu0 0
        %336 = vperm.xlu0 %335, %v315
        %v337 = vpop.permute.xlu0 %336
        %339 = vset.pattern.permute.xlu0 0
        %340 = vperm.xlu0 %339, %v316
        %v341 = vpop.permute.xlu0 %340
        %343 = vset.pattern.permute.xlu0 0
        %344 = vperm.xlu0 %343, %v317
        %v345 = vpop.permute.xlu0 %344
        %347 = vset.pattern.permute.xlu0 0
        %348 = vperm.xlu0 %347, %v318
        %v349 = vpop.permute.xlu0 %348
        %351 = vset.pattern.permute.xlu0 0
        %352 = vperm.xlu0 %351, %v328
        %v353 = vpop.permute.xlu0 %352
        %355 = vset.pattern.permute.xlu0 0
        %356 = vperm.xlu0 %355, %v330
        %v357 = vpop.permute.xlu0 %356
        %359 = vset.pattern.permute.xlu0 0
        %360 = vperm.xlu0 %359, %v332
        %v361 = vpop.permute.xlu0 %360
        %363 = vset.pattern.permute.xlu0 0
        %364 = vperm.xlu0 %363, %v334
        %v365 = vpop.permute.xlu0 %364
        %v368 = vlaneseq
        %v369 = vshrl.u32 %v368, 7
        %v370 = vsub.s32 0, %v369
        %v371 = vrot.slane %v319, %v370
        %v372 = vlaneseq
        %v373 = vshrl.u32 %v372, 7
        %v374 = vsub.s32 4, %v373
        %v375 = vrot.slane %v319, %v374
        %v378 = vlaneseq
        %v379 = vshrl.u32 %v378, 7
        %v380 = vsub.s32 0, %v379
        %v381 = vrot.slane %v371, %v380
        %v382 = vlaneseq
        %v383 = vshrl.u32 %v382, 7
        %v384 = vsub.s32 0, %v383
        %v385 = vrot.slane %v375, %v384
        %v386 = vmul.f32 %v337, %v381
        %v387 = vmul.f32 %v337, %v385
        %v388 = vmul.f32 %v341, %v381
        %v389 = vmul.f32 %v341, %v385
        %v390 = vmul.f32 %v345, %v381
        %v391 = vmul.f32 %v345, %v385
        %v392 = vmul.f32 %v349, %v381
        %v393 = vmul.f32 %v349, %v385
        %v394 = vmul.f32 %v353, %v381
        %v395 = vmul.f32 %v353, %v385
        %v396 = vmul.f32 %v357, %v381
        %v397 = vmul.f32 %v357, %v385
        %v398 = vmul.f32 %v361, %v381
        %v399 = vmul.f32 %v361, %v385
        %v400 = vmul.f32 %v365, %v381
        %v401 = vmul.f32 %v365, %v385
        %v402 = vlaneseq
        %v403 = vshrl.u32 %v402, 7
        %v404 = vsub.s32 1, %v403
        %v405 = vrot.slane %v319, %v404
        %v406 = vlaneseq
        %v407 = vshrl.u32 %v406, 7
        %v408 = vsub.s32 5, %v407
        %v409 = vrot.slane %v319, %v408
        %v412 = vlaneseq
        %v413 = vshrl.u32 %v412, 7
        %v414 = vsub.s32 1, %v413
        %v415 = vrot.slane %v405, %v414
        %v416 = vlaneseq
        %v417 = vshrl.u32 %v416, 7
        %v418 = vsub.s32 1, %v417
        %v419 = vrot.slane %v409, %v418
        %v420 = vmul.f32 %v337, %v415
        %v421 = vmul.f32 %v337, %v419
        %v422 = vmul.f32 %v341, %v415
        %v423 = vmul.f32 %v341, %v419
        %v424 = vmul.f32 %v345, %v415
        %v425 = vmul.f32 %v345, %v419
        %v426 = vmul.f32 %v349, %v415
        %v427 = vmul.f32 %v349, %v419
        %v428 = vmul.f32 %v353, %v415
        %v429 = vmul.f32 %v353, %v419
        %v430 = vmul.f32 %v357, %v415
        %v431 = vmul.f32 %v357, %v419
        %v432 = vmul.f32 %v361, %v415
        %v433 = vmul.f32 %v361, %v419
        %v434 = vmul.f32 %v365, %v415
        %v435 = vmul.f32 %v365, %v419
        %v436 = vrot.slane %v420, 1
        %v437 = vrot.slane %v421, 1
        %v438 = vrot.slane %v422, 1
        %v439 = vrot.slane %v423, 1
        %v440 = vrot.slane %v424, 1
        %v441 = vrot.slane %v425, 1
        %v442 = vrot.slane %v426, 1
        %v443 = vrot.slane %v427, 1
        %v444 = vrot.slane %v428, 1
        %v445 = vrot.slane %v429, 1
        %v446 = vrot.slane %v430, 1
        %v447 = vrot.slane %v431, 1
        %v448 = vrot.slane %v432, 1
        %v449 = vrot.slane %v433, 1
        %v450 = vrot.slane %v434, 1
        %v451 = vrot.slane %v435, 1
        %v452 = vlaneseq
        %v453 = vshrl.u32 %v452, 7
        %vm454 = vcmp.lt.s32.totalorder %v453, 7
        %v455 = vsel %vm454, %v448, %v450
        %v456 = vsel %vm454, %v449, %v451
        %v457 = vsel %vm454, %v446, %v448
        %v458 = vsel %vm454, %v447, %v449
        %v459 = vsel %vm454, %v444, %v446
        %v460 = vsel %vm454, %v445, %v447
        %v461 = vsel %vm454, %v442, %v444
        %v462 = vsel %vm454, %v443, %v445
        %v463 = vsel %vm454, %v440, %v442
        %v464 = vsel %vm454, %v441, %v443
        %v465 = vsel %vm454, %v438, %v440
        %v466 = vsel %vm454, %v439, %v441
        %v467 = vsel %vm454, %v436, %v438
        %v468 = vsel %vm454, %v437, %v439
        %v469 = vsel %vm454, %v450, %v436
        %v470 = vsel %vm454, %v451, %v437
        %v471 = vadd.f32 %v386, %v467
        %v472 = vadd.f32 %v387, %v468
        %v473 = vadd.f32 %v388, %v465
        %v474 = vadd.f32 %v389, %v466
        %v475 = vadd.f32 %v390, %v463
        %v476 = vadd.f32 %v391, %v464
        %v477 = vadd.f32 %v392, %v461
        %v478 = vadd.f32 %v393, %v462
        %v479 = vadd.f32 %v394, %v459
        %v480 = vadd.f32 %v395, %v460
        %v481 = vadd.f32 %v396, %v457
        %v482 = vadd.f32 %v397, %v458
        %v483 = vadd.f32 %v398, %v455
        %v484 = vadd.f32 %v399, %v456
        %v485 = vadd.f32 %v400, %v469
        %v486 = vadd.f32 %v401, %v470
        %v487 = vlaneseq
        %v488 = vshrl.u32 %v487, 7
        %v489 = vsub.s32 2, %v488
        %v490 = vrot.slane %v319, %v489
        %v491 = vlaneseq
        %v492 = vshrl.u32 %v491, 7
        %v493 = vsub.s32 6, %v492
        %v494 = vrot.slane %v319, %v493
        %v497 = vlaneseq
        %v498 = vshrl.u32 %v497, 7
        %v499 = vsub.s32 2, %v498
        %v500 = vrot.slane %v490, %v499
        %v501 = vlaneseq
        %v502 = vshrl.u32 %v501, 7
        %v503 = vsub.s32 2, %v502
        %v504 = vrot.slane %v494, %v503
        %v505 = vmul.f32 %v337, %v500
        %v506 = vmul.f32 %v337, %v504
        %v507 = vmul.f32 %v341, %v500
        %v508 = vmul.f32 %v341, %v504
        %v509 = vmul.f32 %v345, %v500
        %v510 = vmul.f32 %v345, %v504
        %v511 = vmul.f32 %v349, %v500
        %v512 = vmul.f32 %v349, %v504
        %v513 = vmul.f32 %v353, %v500
        %v514 = vmul.f32 %v353, %v504
        %v515 = vmul.f32 %v357, %v500
        %v516 = vmul.f32 %v357, %v504
        %v517 = vmul.f32 %v361, %v500
        %v518 = vmul.f32 %v361, %v504
        %v519 = vmul.f32 %v365, %v500
        %v520 = vmul.f32 %v365, %v504
        %v521 = vrot.slane %v505, 2
        %v522 = vrot.slane %v506, 2
        %v523 = vrot.slane %v507, 2
        %v524 = vrot.slane %v508, 2
        %v525 = vrot.slane %v509, 2
        %v526 = vrot.slane %v510, 2
        %v527 = vrot.slane %v511, 2
        %v528 = vrot.slane %v512, 2
        %v529 = vrot.slane %v513, 2
        %v530 = vrot.slane %v514, 2
        %v531 = vrot.slane %v515, 2
        %v532 = vrot.slane %v516, 2
        %v533 = vrot.slane %v517, 2
        %v534 = vrot.slane %v518, 2
        %v535 = vrot.slane %v519, 2
        %v536 = vrot.slane %v520, 2
        %vm537 = vcmp.lt.s32.totalorder %v453, 6
        %v538 = vsel %vm537, %v533, %v535
        %v539 = vsel %vm537, %v534, %v536
        %v540 = vsel %vm537, %v531, %v533
        %v541 = vsel %vm537, %v532, %v534
        %v542 = vsel %vm537, %v529, %v531
        %v543 = vsel %vm537, %v530, %v532
        %v544 = vsel %vm537, %v527, %v529
        %v545 = vsel %vm537, %v528, %v530
        %v546 = vsel %vm537, %v525, %v527
        %v547 = vsel %vm537, %v526, %v528
        %v548 = vsel %vm537, %v523, %v525
        %v549 = vsel %vm537, %v524, %v526
        %v550 = vsel %vm537, %v521, %v523
        %v551 = vsel %vm537, %v522, %v524
        %v552 = vsel %vm537, %v535, %v521
        %v553 = vsel %vm537, %v536, %v522
        %v554 = vadd.f32 %v471, %v550
        %v555 = vadd.f32 %v472, %v551
        %v556 = vadd.f32 %v473, %v548
        %v557 = vadd.f32 %v474, %v549
        %v558 = vadd.f32 %v475, %v546
        %v559 = vadd.f32 %v476, %v547
        %v560 = vadd.f32 %v477, %v544
        %v561 = vadd.f32 %v478, %v545
        %v562 = vadd.f32 %v479, %v542
        %v563 = vadd.f32 %v480, %v543
        %v564 = vadd.f32 %v481, %v540
        %v565 = vadd.f32 %v482, %v541
        %v566 = vadd.f32 %v483, %v538
        %v567 = vadd.f32 %v484, %v539
        %v568 = vadd.f32 %v485, %v552
        %v569 = vadd.f32 %v486, %v553
        %v571 = vlaneseq
        %v572 = vshrl.u32 %v571, 7
        %v573 = vsub.s32 0, %v572
        %v574 = vrot.slane %v320, %v573
        %v575 = vlaneseq
        %v576 = vshrl.u32 %v575, 7
        %v577 = vsub.s32 1, %v576
        %v578 = vrot.slane %v320, %v577
        %v581 = vadd.f32 %v554, %v574
        %v582 = vadd.f32 %v555, %v578
        %v583 = vadd.f32 %v556, %v574
        %v584 = vadd.f32 %v557, %v578
        %v585 = vadd.f32 %v558, %v574
        %v586 = vadd.f32 %v559, %v578
        %v587 = vadd.f32 %v560, %v574
        %v588 = vadd.f32 %v561, %v578
        %v589 = vadd.f32 %v562, %v574
        %v590 = vadd.f32 %v563, %v578
        %v591 = vadd.f32 %v564, %v574
        %v592 = vadd.f32 %v565, %v578
        %v593 = vadd.f32 %v566, %v574
        %v594 = vadd.f32 %v567, %v578
        %v595 = vadd.f32 %v568, %v574
        %v596 = vadd.f32 %v569, %v578
        %v597 = vmax.f32 %v581, 0.0
        %v598 = vmax.f32 %v582, 0.0
        %v599 = vmax.f32 %v583, 0.0
        %v600 = vmax.f32 %v584, 0.0
        %v601 = vmax.f32 %v585, 0.0
        %v602 = vmax.f32 %v586, 0.0
        %v603 = vmax.f32 %v587, 0.0
        %v604 = vmax.f32 %v588, 0.0
        %v605 = vmax.f32 %v589, 0.0
        %v606 = vmax.f32 %v590, 0.0
        %v607 = vmax.f32 %v591, 0.0
        %v608 = vmax.f32 %v592, 0.0
        %v609 = vmax.f32 %v593, 0.0
        %v610 = vmax.f32 %v594, 0.0
        %v611 = vmax.f32 %v595, 0.0
        %v612 = vmax.f32 %v596, 0.0
        %v613 = vrot.slane %v597, 1
        %v614 = vrot.slane %v598, 1
        %v615 = vrot.slane %v599, 1
        %v616 = vrot.slane %v600, 1
        %v617 = vrot.slane %v601, 1
        %v618 = vrot.slane %v602, 1
        %v619 = vrot.slane %v603, 1
        %v620 = vrot.slane %v604, 1
        %v621 = vrot.slane %v605, 1
        %v622 = vrot.slane %v606, 1
        %v623 = vrot.slane %v607, 1
        %v624 = vrot.slane %v608, 1
        %v625 = vrot.slane %v609, 1
        %v626 = vrot.slane %v610, 1
        %v627 = vrot.slane %v611, 1
        %v628 = vrot.slane %v612, 1
        %v629 = vsel %vm454, %v625, %v627
        %v630 = vsel %vm454, %v626, %v628
        %v631 = vsel %vm454, %v623, %v625
        %v632 = vsel %vm454, %v624, %v626
        %v633 = vsel %vm454, %v621, %v623
        %v634 = vsel %vm454, %v622, %v624
        %v635 = vsel %vm454, %v619, %v621
        %v636 = vsel %vm454, %v620, %v622
        %v637 = vsel %vm454, %v617, %v619
        %v638 = vsel %vm454, %v618, %v620
        %v639 = vsel %vm454, %v615, %v617
        %v640 = vsel %vm454, %v616, %v618
        %v641 = vsel %vm454, %v613, %v615
        %v642 = vsel %vm454, %v614, %v616
        %v643 = vsel %vm454, %v627, %v613
        %v644 = vsel %vm454, %v628, %v614
        %v645 = vrot.slane %v597, 2
        %v646 = vrot.slane %v598, 2
        %v647 = vrot.slane %v599, 2
        %v648 = vrot.slane %v600, 2
        %v649 = vrot.slane %v601, 2
        %v650 = vrot.slane %v602, 2
        %v651 = vrot.slane %v603, 2
        %v652 = vrot.slane %v604, 2
        %v653 = vrot.slane %v605, 2
        %v654 = vrot.slane %v606, 2
        %v655 = vrot.slane %v607, 2
        %v656 = vrot.slane %v608, 2
        %v657 = vrot.slane %v609, 2
        %v658 = vrot.slane %v610, 2
        %v659 = vrot.slane %v611, 2
        %v660 = vrot.slane %v612, 2
        %v661 = vsel %vm537, %v657, %v659
        %v662 = vsel %vm537, %v658, %v660
        %v663 = vsel %vm537, %v655, %v657
        %v664 = vsel %vm537, %v656, %v658
        %v665 = vsel %vm537, %v653, %v655
        %v666 = vsel %vm537, %v654, %v656
        %v667 = vsel %vm537, %v651, %v653
        %v668 = vsel %vm537, %v652, %v654
        %v669 = vsel %vm537, %v649, %v651
        %v670 = vsel %vm537, %v650, %v652
        %v671 = vsel %vm537, %v647, %v649
        %v672 = vsel %vm537, %v648, %v650
        %v673 = vsel %vm537, %v645, %v647
        %v674 = vsel %vm537, %v646, %v648
        %v675 = vsel %vm537, %v659, %v645
        %v676 = vsel %vm537, %v660, %v646
        %v677 = vpack.c.bf16 %v599, %v597
        %v678 = vpack.c.bf16 %v600, %v598
        %v679 = vpack.c.bf16 %v639, %v641
        %v680 = vpack.c.bf16 %v640, %v642
        %v681 = vpack.c.bf16 %v671, %v673
        %v682 = vpack.c.bf16 %v672, %v674
        %v683 = vpack.c.bf16 %v603, %v601
        %v684 = vpack.c.bf16 %v604, %v602
        %v685 = vpack.c.bf16 %v635, %v637
        %v686 = vpack.c.bf16 %v636, %v638
        %v687 = vpack.c.bf16 %v667, %v669
        %v688 = vpack.c.bf16 %v668, %v670
        %v689 = vpack.c.bf16 %v607, %v605
        %v690 = vpack.c.bf16 %v608, %v606
        %v691 = vpack.c.bf16 %v631, %v633
        %v692 = vpack.c.bf16 %v632, %v634
        %v693 = vpack.c.bf16 %v663, %v665
        %v694 = vpack.c.bf16 %v664, %v666
        %v695 = vpack.c.bf16 %v611, %v609
        %v696 = vpack.c.bf16 %v612, %v610
        %v697 = vpack.c.bf16 %v643, %v629
        %v698 = vpack.c.bf16 %v644, %v630
        %v699 = vpack.c.bf16 %v675, %v661
        %v700 = vpack.c.bf16 %v676, %v662
        %v701 = vld [vmem:[#allocation2] sm:$0xff]
        %v702 = vld [vmem:[#allocation2 + $0x8] sm:$0xff]
        %v703 = vld [vmem:[#allocation2 + $0x10] sm:$0xff]
        %v704 = vld [vmem:[#allocation2 + $0x18] sm:$0xff]
        %v705 = vld [vmem:[#allocation2 + $0x20] sm:$0xff]
        %v706 = vld [vmem:[#allocation2 + $0x28] sm:$0xff]
        %v707 = vld [vmem:[#allocation2 + $0x30] sm:$0xff]
        %v708 = vld [vmem:[#allocation2 + $0x38] sm:$0xff]
        %v709 = vld [vmem:[#allocation2 + $0x40] sm:$0xff]
        %v710 = vld [vmem:[#allocation2 + $0x48] sm:$0xff]
        %v711 = vld [vmem:[#allocation2 + $0x50] sm:$0xff]
        %v712 = vld [vmem:[#allocation2 + $0x58] sm:$0xff]
        %v713 = vld [vmem:[#allocation2 + $0x60] sm:$0xff]
        %v714 = vld [vmem:[#allocation2 + $0x68] sm:$0xff]
        %v715 = vld [vmem:[#allocation2 + $0x70] sm:$0xff]
        %v716 = vld [vmem:[#allocation2 + $0x78] sm:$0xff]
        %v717 = vld [vmem:[#allocation2 + $0x80] sm:$0xff]
        %v718 = vld [vmem:[#allocation2 + $0x88] sm:$0xff]
        %v719 = vld [vmem:[#allocation2 + $0x90] sm:$0xff]
        %v720 = vld [vmem:[#allocation2 + $0x98] sm:$0xff]
        %v721 = vld [vmem:[#allocation2 + $0xa0] sm:$0xff]
        %v722 = vld [vmem:[#allocation2 + $0xa8] sm:$0xff]
        %v723 = vld [vmem:[#allocation2 + $0xb0] sm:$0xff]
        %v724 = vld [vmem:[#allocation2 + $0xb8] sm:$0xff]
        %v725 = vld [vmem:[#allocation2 + $0xc0] sm:$0xff]
        %v726 = vld [vmem:[#allocation2 + $0xc8] sm:$0xff]
        %v727 = vld [vmem:[#allocation2 + $0xd0] sm:$0xff]
        %v728 = vld [vmem:[#allocation2 + $0xd8] sm:$0xff]
        %v729 = vld [vmem:[#allocation2 + $0xe0] sm:$0xff]
        %v730 = vld [vmem:[#allocation2 + $0xe8] sm:$0xff]
        %v731 = vld [vmem:[#allocation2 + $0xf0] sm:$0xff]
        %v732 = vld [vmem:[#allocation2 + $0xf8] sm:$0xff]
        %v733 = vld [vmem:[#allocation2 + $0x100] sm:$0xff]
        %v734 = vld [vmem:[#allocation2 + $0x108] sm:$0xff]
        %v735 = vld [vmem:[#allocation2 + $0x110] sm:$0xff]
        %v736 = vld [vmem:[#allocation2 + $0x118] sm:$0xff]
        %v737 = vld [vmem:[#allocation2 + $0x120] sm:$0xff]
        %v738 = vld [vmem:[#allocation2 + $0x128] sm:$0xff]
        %v739 = vld [vmem:[#allocation2 + $0x130] sm:$0xff]
        %v740 = vld [vmem:[#allocation2 + $0x138] sm:$0xff]
        %v741 = vld [vmem:[#allocation2 + $0x140] sm:$0xff]
        %v742 = vld [vmem:[#allocation2 + $0x148] sm:$0xff]
        %v743 = vld [vmem:[#allocation2 + $0x150] sm:$0xff]
        %v744 = vld [vmem:[#allocation2 + $0x158] sm:$0xff]
        %v745 = vld [vmem:[#allocation2 + $0x160] sm:$0xff]
        %v746 = vld [vmem:[#allocation2 + $0x168] sm:$0xff]
        %v747 = vld [vmem:[#allocation2 + $0x170] sm:$0xff]
        %v748 = vld [vmem:[#allocation2 + $0x178] sm:$0xff]
        %v749 = vld [vmem:[#allocation2 + $0x180] sm:$0xff]
        %v750 = vld [vmem:[#allocation2 + $0x188] sm:$0xff]
        %v751 = vld [vmem:[#allocation2 + $0x190] sm:$0xff]
        %v752 = vld [vmem:[#allocation2 + $0x198] sm:$0xff]
        %v753 = vld [vmem:[#allocation2 + $0x1a0] sm:$0xff]
        %v754 = vld [vmem:[#allocation2 + $0x1a8] sm:$0xff]
        %v755 = vld [vmem:[#allocation2 + $0x1b0] sm:$0xff]
        %v756 = vld [vmem:[#allocation2 + $0x1b8] sm:$0xff]
        %v757 = vld [vmem:[#allocation2 + $0x1c0] sm:$0xff]
        %v758 = vld [vmem:[#allocation2 + $0x1c8] sm:$0xff]
        %v759 = vld [vmem:[#allocation2 + $0x1d0] sm:$0xff]
        %v760 = vld [vmem:[#allocation2 + $0x1d8] sm:$0xff]
        %v761 = vld [vmem:[#allocation2 + $0x1e0] sm:$0xff]
        %v762 = vld [vmem:[#allocation2 + $0x1e8] sm:$0xff]
        %v763 = vld [vmem:[#allocation2 + $0x1f0] sm:$0xff]
        %v764 = vld [vmem:[#allocation2 + $0x1f8] sm:$0xff]
        %v765 = vld [vmem:[#allocation2 + $0x200] sm:$0xff]
        %v766 = vld [vmem:[#allocation2 + $0x208] sm:$0xff]
        %v767 = vld [vmem:[#allocation2 + $0x210] sm:$0xff]
        %v768 = vld [vmem:[#allocation2 + $0x218] sm:$0xff]
        %v769 = vld [vmem:[#allocation2 + $0x220] sm:$0xff]
        %v770 = vld [vmem:[#allocation2 + $0x228] sm:$0xff]
        %v771 = vld [vmem:[#allocation2 + $0x230] sm:$0xff]
        %v772 = vld [vmem:[#allocation2 + $0x238] sm:$0xff]
        %v773 = vld [vmem:[#allocation2 + $0x240] sm:$0xff]
        %v774 = vld [vmem:[#allocation2 + $0x248] sm:$0xff]
        %v775 = vld [vmem:[#allocation2 + $0x250] sm:$0xff]
        %v776 = vld [vmem:[#allocation2 + $0x258] sm:$0xff]
        %v777 = vld [vmem:[#allocation2 + $0x260] sm:$0xff]
        %v778 = vld [vmem:[#allocation2 + $0x268] sm:$0xff]
        %v779 = vld [vmem:[#allocation2 + $0x270] sm:$0xff]
        %v780 = vld [vmem:[#allocation2 + $0x278] sm:$0xff]
        %v781 = vld [vmem:[#allocation2 + $0x280] sm:$0xff]
        %v782 = vld [vmem:[#allocation2 + $0x288] sm:$0xff]
        %v783 = vld [vmem:[#allocation2 + $0x290] sm:$0xff]
        %v784 = vld [vmem:[#allocation2 + $0x298] sm:$0xff]
        %v785 = vld [vmem:[#allocation2 + $0x2a0] sm:$0xff]
        %v786 = vld [vmem:[#allocation2 + $0x2a8] sm:$0xff]
        %v787 = vld [vmem:[#allocation2 + $0x2b0] sm:$0xff]
        %v788 = vld [vmem:[#allocation2 + $0x2b8] sm:$0xff]
        %v789 = vld [vmem:[#allocation2 + $0x2c0] sm:$0xff]
        %v790 = vld [vmem:[#allocation2 + $0x2c8] sm:$0xff]
        %v791 = vld [vmem:[#allocation2 + $0x2d0] sm:$0xff]
        %v792 = vld [vmem:[#allocation2 + $0x2d8] sm:$0xff]
        %v793 = vld [vmem:[#allocation2 + $0x2e0] sm:$0xff]
        %v794 = vld [vmem:[#allocation2 + $0x2e8] sm:$0xff]
        %v795 = vld [vmem:[#allocation2 + $0x2f0] sm:$0xff]
        %v796 = vld [vmem:[#allocation2 + $0x2f8] sm:$0xff]
        %v798 = vlaneseq
        %v799 = vshrl.u32 %v798, 7
        %v800 = vsub.s32 0, %v799
        %v801 = vrot.slane %v321, %v800
        %v802 = vlaneseq
        %v803 = vshrl.u32 %v802, 7
        %v804 = vsub.s32 1, %v803
        %v805 = vrot.slane %v321, %v804
        %v904 = vunpack.c.l.b16 %v701
        %v905 = vunpack.c.h.b16 %v701
        %v906 = vunpack.c.l.b16 %v702
        %v907 = vunpack.c.h.b16 %v702
        %v908 = vunpack.c.l.b16 %v703
        %v909 = vunpack.c.h.b16 %v703
        %v910 = vunpack.c.l.b16 %v704
        %v911 = vunpack.c.h.b16 %v704
        %v912 = vunpack.c.l.b16 %v705
        %v913 = vunpack.c.h.b16 %v705
        %v914 = vunpack.c.l.b16 %v706
        %v915 = vunpack.c.h.b16 %v706
        %v916 = vunpack.c.l.b16 %v707
        %v917 = vunpack.c.h.b16 %v707
        %v918 = vunpack.c.l.b16 %v708
        %v919 = vunpack.c.h.b16 %v708
        %v920 = vunpack.c.l.b16 %v709
        %v921 = vunpack.c.h.b16 %v709
        %v922 = vunpack.c.l.b16 %v710
        %v923 = vunpack.c.h.b16 %v710
        %v924 = vunpack.c.l.b16 %v711
        %v925 = vunpack.c.h.b16 %v711
        %v926 = vunpack.c.l.b16 %v712
        %v927 = vunpack.c.h.b16 %v712
        %v928 = vunpack.c.l.b16 %v713
        %v929 = vunpack.c.h.b16 %v713
        %v930 = vunpack.c.l.b16 %v714
        %v931 = vunpack.c.h.b16 %v714
        %v932 = vunpack.c.l.b16 %v715
        %v933 = vunpack.c.h.b16 %v715
        %v934 = vunpack.c.l.b16 %v716
        %v935 = vunpack.c.h.b16 %v716
        %v936 = vunpack.c.l.b16 %v717
        %v937 = vunpack.c.h.b16 %v717
        %v938 = vunpack.c.l.b16 %v718
        %v939 = vunpack.c.h.b16 %v718
        %v940 = vunpack.c.l.b16 %v719
        %v941 = vunpack.c.h.b16 %v719
        %v942 = vunpack.c.l.b16 %v720
        %v943 = vunpack.c.h.b16 %v720
        %v944 = vunpack.c.l.b16 %v721
        %v945 = vunpack.c.h.b16 %v721
        %v946 = vunpack.c.l.b16 %v722
        %v947 = vunpack.c.h.b16 %v722
        %v948 = vunpack.c.l.b16 %v723
        %v949 = vunpack.c.h.b16 %v723
        %v950 = vunpack.c.l.b16 %v724
        %v951 = vunpack.c.h.b16 %v724
        %v952 = vunpack.c.l.b16 %v725
        %v953 = vunpack.c.h.b16 %v725
        %v954 = vunpack.c.l.b16 %v726
        %v955 = vunpack.c.h.b16 %v726
        %v956 = vunpack.c.l.b16 %v727
        %v957 = vunpack.c.h.b16 %v727
        %v958 = vunpack.c.l.b16 %v728
        %v959 = vunpack.c.h.b16 %v728
        %v960 = vunpack.c.l.b16 %v729
        %v961 = vunpack.c.h.b16 %v729
        %v962 = vunpack.c.l.b16 %v730
        %v963 = vunpack.c.h.b16 %v730
        %v964 = vunpack.c.l.b16 %v731
        %v965 = vunpack.c.h.b16 %v731
        %v966 = vunpack.c.l.b16 %v732
        %v967 = vunpack.c.h.b16 %v732
        %v968 = vunpack.c.l.b16 %v733
        %v969 = vunpack.c.h.b16 %v733
        %v970 = vunpack.c.l.b16 %v734
        %v971 = vunpack.c.h.b16 %v734
        %v972 = vunpack.c.l.b16 %v735
        %v973 = vunpack.c.h.b16 %v735
        %v974 = vunpack.c.l.b16 %v736
        %v975 = vunpack.c.h.b16 %v736
        %v976 = vunpack.c.l.b16 %v737
        %v977 = vunpack.c.h.b16 %v737
        %v978 = vunpack.c.l.b16 %v738
        %v979 = vunpack.c.h.b16 %v738
        %v980 = vunpack.c.l.b16 %v739
        %v981 = vunpack.c.h.b16 %v739
        %v982 = vunpack.c.l.b16 %v740
        %v983 = vunpack.c.h.b16 %v740
        %v984 = vunpack.c.l.b16 %v741
        %v985 = vunpack.c.h.b16 %v741
        %v986 = vunpack.c.l.b16 %v742
        %v987 = vunpack.c.h.b16 %v742
        %v988 = vunpack.c.l.b16 %v743
        %v989 = vunpack.c.h.b16 %v743
        %v990 = vunpack.c.l.b16 %v744
        %v991 = vunpack.c.h.b16 %v744
        %v992 = vunpack.c.l.b16 %v745
        %v993 = vunpack.c.h.b16 %v745
        %v994 = vunpack.c.l.b16 %v746
        %v995 = vunpack.c.h.b16 %v746
        %v996 = vunpack.c.l.b16 %v747
        %v997 = vunpack.c.h.b16 %v747
        %v998 = vunpack.c.l.b16 %v748
        %v999 = vunpack.c.h.b16 %v748
        %v1000 = vunpack.c.l.b16 %v749
        %v1001 = vunpack.c.h.b16 %v749
        %v1002 = vunpack.c.l.b16 %v750
        %v1003 = vunpack.c.h.b16 %v750
        %v1004 = vunpack.c.l.b16 %v751
        %v1005 = vunpack.c.h.b16 %v751
        %v1006 = vunpack.c.l.b16 %v752
        %v1007 = vunpack.c.h.b16 %v752
        %v1008 = vunpack.c.l.b16 %v753
        %v1009 = vunpack.c.h.b16 %v753
        %v1010 = vunpack.c.l.b16 %v754
        %v1011 = vunpack.c.h.b16 %v754
        %v1012 = vunpack.c.l.b16 %v755
        %v1013 = vunpack.c.h.b16 %v755
        %v1014 = vunpack.c.l.b16 %v756
        %v1015 = vunpack.c.h.b16 %v756
        %v1016 = vunpack.c.l.b16 %v757
        %v1017 = vunpack.c.h.b16 %v757
        %v1018 = vunpack.c.l.b16 %v758
        %v1019 = vunpack.c.h.b16 %v758
        %v1020 = vunpack.c.l.b16 %v759
        %v1021 = vunpack.c.h.b16 %v759
        %v1022 = vunpack.c.l.b16 %v760
        %v1023 = vunpack.c.h.b16 %v760
        %v1024 = vunpack.c.l.b16 %v761
        %v1025 = vunpack.c.h.b16 %v761
        %v1026 = vunpack.c.l.b16 %v762
        %v1027 = vunpack.c.h.b16 %v762
        %v1028 = vunpack.c.l.b16 %v763
        %v1029 = vunpack.c.h.b16 %v763
        %v1030 = vunpack.c.l.b16 %v764
        %v1031 = vunpack.c.h.b16 %v764
        %v1032 = vunpack.c.l.b16 %v765
        %v1033 = vunpack.c.h.b16 %v765
        %v1034 = vunpack.c.l.b16 %v766
        %v1035 = vunpack.c.h.b16 %v766
        %v1036 = vunpack.c.l.b16 %v767
        %v1037 = vunpack.c.h.b16 %v767
        %v1038 = vunpack.c.l.b16 %v768
        %v1039 = vunpack.c.h.b16 %v768
        %v1040 = vunpack.c.l.b16 %v769
        %v1041 = vunpack.c.h.b16 %v769
        %v1042 = vunpack.c.l.b16 %v770
        %v1043 = vunpack.c.h.b16 %v770
        %v1044 = vunpack.c.l.b16 %v771
        %v1045 = vunpack.c.h.b16 %v771
        %v1046 = vunpack.c.l.b16 %v772
        %v1047 = vunpack.c.h.b16 %v772
        %v1048 = vunpack.c.l.b16 %v773
        %v1049 = vunpack.c.h.b16 %v773
        %v1050 = vunpack.c.l.b16 %v774
        %v1051 = vunpack.c.h.b16 %v774
        %v1052 = vunpack.c.l.b16 %v775
        %v1053 = vunpack.c.h.b16 %v775
        %v1054 = vunpack.c.l.b16 %v776
        %v1055 = vunpack.c.h.b16 %v776
        %v1056 = vunpack.c.l.b16 %v777
        %v1057 = vunpack.c.h.b16 %v777
        %v1058 = vunpack.c.l.b16 %v778
        %v1059 = vunpack.c.h.b16 %v778
        %v1060 = vunpack.c.l.b16 %v779
        %v1061 = vunpack.c.h.b16 %v779
        %v1062 = vunpack.c.l.b16 %v780
        %v1063 = vunpack.c.h.b16 %v780
        %v1064 = vunpack.c.l.b16 %v781
        %v1065 = vunpack.c.h.b16 %v781
        %v1066 = vunpack.c.l.b16 %v782
        %v1067 = vunpack.c.h.b16 %v782
        %v1068 = vunpack.c.l.b16 %v783
        %v1069 = vunpack.c.h.b16 %v783
        %v1070 = vunpack.c.l.b16 %v784
        %v1071 = vunpack.c.h.b16 %v784
        %v1072 = vunpack.c.l.b16 %v785
        %v1073 = vunpack.c.h.b16 %v785
        %v1074 = vunpack.c.l.b16 %v786
        %v1075 = vunpack.c.h.b16 %v786
        %v1076 = vunpack.c.l.b16 %v787
        %v1077 = vunpack.c.h.b16 %v787
        %v1078 = vunpack.c.l.b16 %v788
        %v1079 = vunpack.c.h.b16 %v788
        %v1080 = vunpack.c.l.b16 %v789
        %v1081 = vunpack.c.h.b16 %v789
        %v1082 = vunpack.c.l.b16 %v790
        %v1083 = vunpack.c.h.b16 %v790
        %v1084 = vunpack.c.l.b16 %v791
        %v1085 = vunpack.c.h.b16 %v791
        %v1086 = vunpack.c.l.b16 %v792
        %v1087 = vunpack.c.h.b16 %v792
        %v1088 = vunpack.c.l.b16 %v793
        %v1089 = vunpack.c.h.b16 %v793
        %v1090 = vunpack.c.l.b16 %v794
        %v1091 = vunpack.c.h.b16 %v794
        %v1092 = vunpack.c.l.b16 %v795
        %v1093 = vunpack.c.h.b16 %v795
        %v1094 = vunpack.c.l.b16 %v796
        %v1095 = vunpack.c.h.b16 %v796
        %v1096 = vpack.c.b16 %v906, %v904
        %v1097 = vpack.c.b16 %v907, %v905
        %v1098 = vpack.c.b16 %v910, %v908
        %v1099 = vpack.c.b16 %v911, %v909
        %v1100 = vpack.c.b16 %v914, %v912
        %v1101 = vpack.c.b16 %v915, %v913
        %v1102 = vpack.c.b16 %v918, %v916
        %v1103 = vpack.c.b16 %v919, %v917
        %v1104 = vpack.c.b16 %v922, %v920
        %v1105 = vpack.c.b16 %v923, %v921
        %v1106 = vpack.c.b16 %v926, %v924
        %v1107 = vpack.c.b16 %v927, %v925
        %v1108 = vpack.c.b16 %v930, %v928
        %v1109 = vpack.c.b16 %v931, %v929
        %v1110 = vpack.c.b16 %v934, %v932
        %v1111 = vpack.c.b16 %v935, %v933
        %v1112 = vpack.c.b16 %v938, %v936
        %v1113 = vpack.c.b16 %v939, %v937
        %v1114 = vpack.c.b16 %v942, %v940
        %v1115 = vpack.c.b16 %v943, %v941
        %v1116 = vpack.c.b16 %v946, %v944
        %v1117 = vpack.c.b16 %v947, %v945
        %v1118 = vpack.c.b16 %v950, %v948
        %v1119 = vpack.c.b16 %v951, %v949
        %v1120 = vpack.c.b16 %v954, %v952
        %v1121 = vpack.c.b16 %v955, %v953
        %v1122 = vpack.c.b16 %v958, %v956
        %v1123 = vpack.c.b16 %v959, %v957
        %v1124 = vpack.c.b16 %v962, %v960
        %v1125 = vpack.c.b16 %v963, %v961
        %v1126 = vpack.c.b16 %v966, %v964
        %v1127 = vpack.c.b16 %v967, %v965
        %v1128 = vpack.c.b16 %v970, %v968
        %v1129 = vpack.c.b16 %v971, %v969
        %v1130 = vpack.c.b16 %v974, %v972
        %v1131 = vpack.c.b16 %v975, %v973
        %v1132 = vpack.c.b16 %v978, %v976
        %v1133 = vpack.c.b16 %v979, %v977
        %v1134 = vpack.c.b16 %v982, %v980
        %v1135 = vpack.c.b16 %v983, %v981
        %v1136 = vpack.c.b16 %v986, %v984
        %v1137 = vpack.c.b16 %v987, %v985
        %v1138 = vpack.c.b16 %v990, %v988
        %v1139 = vpack.c.b16 %v991, %v989
        %v1140 = vpack.c.b16 %v994, %v992
        %v1141 = vpack.c.b16 %v995, %v993
        %v1142 = vpack.c.b16 %v998, %v996
        %v1143 = vpack.c.b16 %v999, %v997
        %v1144 = vpack.c.b16 %v1002, %v1000
        %v1145 = vpack.c.b16 %v1003, %v1001
        %v1146 = vpack.c.b16 %v1006, %v1004
        %v1147 = vpack.c.b16 %v1007, %v1005
        %v1148 = vpack.c.b16 %v1010, %v1008
        %v1149 = vpack.c.b16 %v1011, %v1009
        %v1150 = vpack.c.b16 %v1014, %v1012
        %v1151 = vpack.c.b16 %v1015, %v1013
        %v1152 = vpack.c.b16 %v1018, %v1016
        %v1153 = vpack.c.b16 %v1019, %v1017
        %v1154 = vpack.c.b16 %v1022, %v1020
        %v1155 = vpack.c.b16 %v1023, %v1021
        %v1156 = vpack.c.b16 %v1026, %v1024
        %v1157 = vpack.c.b16 %v1027, %v1025
        %v1158 = vpack.c.b16 %v1030, %v1028
        %v1159 = vpack.c.b16 %v1031, %v1029
        %v1160 = vpack.c.b16 %v1034, %v1032
        %v1161 = vpack.c.b16 %v1035, %v1033
        %v1162 = vpack.c.b16 %v1038, %v1036
        %v1163 = vpack.c.b16 %v1039, %v1037
        %v1164 = vpack.c.b16 %v1042, %v1040
        %v1165 = vpack.c.b16 %v1043, %v1041
        %v1166 = vpack.c.b16 %v1046, %v1044
        %v1167 = vpack.c.b16 %v1047, %v1045
        %v1168 = vpack.c.b16 %v1050, %v1048
        %v1169 = vpack.c.b16 %v1051, %v1049
        %v1170 = vpack.c.b16 %v1054, %v1052
        %v1171 = vpack.c.b16 %v1055, %v1053
        %v1172 = vpack.c.b16 %v1058, %v1056
        %v1173 = vpack.c.b16 %v1059, %v1057
        %v1174 = vpack.c.b16 %v1062, %v1060
        %v1175 = vpack.c.b16 %v1063, %v1061
        %v1176 = vpack.c.b16 %v1066, %v1064
        %v1177 = vpack.c.b16 %v1067, %v1065
        %v1178 = vpack.c.b16 %v1070, %v1068
        %v1179 = vpack.c.b16 %v1071, %v1069
        %v1180 = vpack.c.b16 %v1074, %v1072
        %v1181 = vpack.c.b16 %v1075, %v1073
        %v1182 = vpack.c.b16 %v1078, %v1076
        %v1183 = vpack.c.b16 %v1079, %v1077
        %v1184 = vpack.c.b16 %v1082, %v1080
        %v1185 = vpack.c.b16 %v1083, %v1081
        %v1186 = vpack.c.b16 %v1086, %v1084
        %v1187 = vpack.c.b16 %v1087, %v1085
        %v1188 = vpack.c.b16 %v1090, %v1088
        %v1189 = vpack.c.b16 %v1091, %v1089
        %v1190 = vpack.c.b16 %v1094, %v1092
        %v1191 = vpack.c.b16 %v1095, %v1093
        %1288 = vmatprep.subr.bf16.mxu0 %v1111
        %1289 = vmatpush1.bf16.msra.mxu0 %v1110
        %1290 = vmatprep.subr.bf16.mxu0 %v1109
        %1291 = vmatpush1.bf16.msra.mxu0 %v1108
        %1292 = vmatprep.subr.bf16.mxu0 %v1107
        %1293 = vmatpush1.bf16.msra.mxu0 %v1106
        %1294 = vmatprep.subr.bf16.mxu0 %v1105
        %1295 = vmatpush1.bf16.msra.mxu0 %v1104
        %1296 = vmatprep.subr.bf16.mxu0 %v1103
        %1297 = vmatpush1.bf16.msra.mxu0 %v1102
        %1298 = vmatprep.subr.bf16.mxu0 %v1101
        %1299 = vmatpush1.bf16.msra.mxu0 %v1100
        %1300 = vmatprep.subr.bf16.mxu0 %v1099
        %1301 = vmatpush1.bf16.msra.mxu0 %v1098
        %1302 = vmatprep.subr.bf16.mxu0 %v1097
        %1303 = vmatpush1.bf16.msra.mxu0 %v1096
        %1304 = vmatprep.subr.bf16.mxu0 %v1127
        %1305 = vmatpush2.bf16.msra.mxu0 %v1126
        %1306 = vmatprep.subr.bf16.mxu0 %v1125
        %1307 = vmatpush2.bf16.msra.mxu0 %v1124
        %1308 = vmatprep.subr.bf16.mxu0 %v1123
        %1309 = vmatpush2.bf16.msra.mxu0 %v1122
        %1310 = vmatprep.subr.bf16.mxu0 %v1121
        %1311 = vmatpush2.bf16.msra.mxu0 %v1120
        %1312 = vmatprep.subr.bf16.mxu0 %v1119
        %1313 = vmatpush2.bf16.msra.mxu0 %v1118
        %1314 = vmatprep.subr.bf16.mxu0 %v1117
        %1315 = vmatpush2.bf16.msra.mxu0 %v1116
        %1316 = vmatprep.subr.bf16.mxu0 %v1115
        %1317 = vmatpush2.bf16.msra.mxu0 %v1114
        %1318 = vmatprep.subr.bf16.mxu0 %v1113
        %1319 = vmatpush2.bf16.msra.mxu0 %v1112
        %1320 = vmatprep.mubr.bf16.mxu0 %v678
        %1321 = vmatmul.mubr.bf16.gmra.mxu0 %v677
        %v1322 = vpop.f32.mrf.mxu0
        %v1323 = vadd.f32 %v801, %v1322
        %v1324 = vpop.f32.mrf.mxu0
        %v1325 = vadd.f32 %v805, %v1324
        %v1326 = vpop.f32.mrf.mxu0
        %v1327 = vadd.f32 %v801, %v1326
        %v1328 = vpop.f32.mrf.mxu0
        %v1329 = vadd.f32 %v805, %v1328
        %1330 = vmatprep.mubr.bf16.mxu0 %v684
        %1331 = vmatmul.mubr.bf16.gmra.mxu0 %v683
        %v1332 = vpop.f32.mrf.mxu0
        %v1333 = vadd.f32 %v801, %v1332
        %v1334 = vpop.f32.mrf.mxu0
        %v1335 = vadd.f32 %v805, %v1334
        %v1336 = vpop.f32.mrf.mxu0
        %v1337 = vadd.f32 %v801, %v1336
        %v1338 = vpop.f32.mrf.mxu0
        %v1339 = vadd.f32 %v805, %v1338
        %1340 = vmatprep.mubr.bf16.mxu0 %v690
        %1341 = vmatmul.mubr.bf16.gmra.mxu0 %v689
        %v1342 = vpop.f32.mrf.mxu0
        %v1343 = vadd.f32 %v801, %v1342
        %v1344 = vpop.f32.mrf.mxu0
        %v1345 = vadd.f32 %v805, %v1344
        %v1346 = vpop.f32.mrf.mxu0
        %v1347 = vadd.f32 %v801, %v1346
        %v1348 = vpop.f32.mrf.mxu0
        %v1349 = vadd.f32 %v805, %v1348
        %1350 = vmatprep.mubr.bf16.mxu0 %v696
        %1351 = vmatmul.mubr.bf16.gmra.mxu0 %v695
        %v1352 = vpop.f32.mrf.mxu0
        %v1353 = vadd.f32 %v801, %v1352
        %v1354 = vpop.f32.mrf.mxu0
        %v1355 = vadd.f32 %v805, %v1354
        %v1356 = vpop.f32.mrf.mxu0
        %v1357 = vadd.f32 %v801, %v1356
        %v1358 = vpop.f32.mrf.mxu0
        %v1359 = vadd.f32 %v805, %v1358
        %1360 = vdwg.mxu0
        %1361 = vmatprep.subr.bf16.mxu0 %v1143
        %1362 = vmatpush1.bf16.msra.mxu0 %v1142
        %1363 = vmatprep.subr.bf16.mxu0 %v1141
        %1364 = vmatpush1.bf16.msra.mxu0 %v1140
        %1365 = vmatprep.subr.bf16.mxu0 %v1139
        %1366 = vmatpush1.bf16.msra.mxu0 %v1138
        %1367 = vmatprep.subr.bf16.mxu0 %v1137
        %1368 = vmatpush1.bf16.msra.mxu0 %v1136
        %1369 = vmatprep.subr.bf16.mxu0 %v1135
        %1370 = vmatpush1.bf16.msra.mxu0 %v1134
        %1371 = vmatprep.subr.bf16.mxu0 %v1133
        %1372 = vmatpush1.bf16.msra.mxu0 %v1132
        %1373 = vmatprep.subr.bf16.mxu0 %v1131
        %1374 = vmatpush1.bf16.msra.mxu0 %v1130
        %1375 = vmatprep.subr.bf16.mxu0 %v1129
        %1376 = vmatpush1.bf16.msra.mxu0 %v1128
        %1377 = vmatprep.subr.bf16.mxu0 %v1159
        %1378 = vmatpush2.bf16.msra.mxu0 %v1158
        %1379 = vmatprep.subr.bf16.mxu0 %v1157
        %1380 = vmatpush2.bf16.msra.mxu0 %v1156
        %1381 = vmatprep.subr.bf16.mxu0 %v1155
        %1382 = vmatpush2.bf16.msra.mxu0 %v1154
        %1383 = vmatprep.subr.bf16.mxu0 %v1153
        %1384 = vmatpush2.bf16.msra.mxu0 %v1152
        %1385 = vmatprep.subr.bf16.mxu0 %v1151
        %1386 = vmatpush2.bf16.msra.mxu0 %v1150
        %1387 = vmatprep.subr.bf16.mxu0 %v1149
        %1388 = vmatpush2.bf16.msra.mxu0 %v1148
        %1389 = vmatprep.subr.bf16.mxu0 %v1147
        %1390 = vmatpush2.bf16.msra.mxu0 %v1146
        %1391 = vmatprep.subr.bf16.mxu0 %v1145
        %1392 = vmatpush2.bf16.msra.mxu0 %v1144
        %1393 = vmatprep.mubr.bf16.mxu0 %v680
        %1394 = vmatmul.mubr.bf16.gmra.mxu0 %v679
        %v1395 = vpop.f32.mrf.mxu0
        %v1396 = vadd.f32 %v1323, %v1395
        %v1397 = vpop.f32.mrf.mxu0
        %v1398 = vadd.f32 %v1325, %v1397
        %v1399 = vpop.f32.mrf.mxu0
        %v1400 = vadd.f32 %v1327, %v1399
        %v1401 = vpop.f32.mrf.mxu0
        %v1402 = vadd.f32 %v1329, %v1401
        %1403 = vmatprep.mubr.bf16.mxu0 %v686
        %1404 = vmatmul.mubr.bf16.gmra.mxu0 %v685
        %v1405 = vpop.f32.mrf.mxu0
        %v1406 = vadd.f32 %v1333, %v1405
        %v1407 = vpop.f32.mrf.mxu0
        %v1408 = vadd.f32 %v1335, %v1407
        %v1409 = vpop.f32.mrf.mxu0
        %v1410 = vadd.f32 %v1337, %v1409
        %v1411 = vpop.f32.mrf.mxu0
        %v1412 = vadd.f32 %v1339, %v1411
        %1413 = vmatprep.mubr.bf16.mxu0 %v692
        %1414 = vmatmul.mubr.bf16.gmra.mxu0 %v691
        %v1415 = vpop.f32.mrf.mxu0
        %v1416 = vadd.f32 %v1343, %v1415
        %v1417 = vpop.f32.mrf.mxu0
        %v1418 = vadd.f32 %v1345, %v1417
        %v1419 = vpop.f32.mrf.mxu0
        %v1420 = vadd.f32 %v1347, %v1419
        %v1421 = vpop.f32.mrf.mxu0
        %v1422 = vadd.f32 %v1349, %v1421
        %1423 = vmatprep.mubr.bf16.mxu0 %v698
        %1424 = vmatmul.mubr.bf16.gmra.mxu0 %v697
        %v1425 = vpop.f32.mrf.mxu0
        %v1426 = vadd.f32 %v1353, %v1425
        %v1427 = vpop.f32.mrf.mxu0
        %v1428 = vadd.f32 %v1355, %v1427
        %v1429 = vpop.f32.mrf.mxu0
        %v1430 = vadd.f32 %v1357, %v1429
        %v1431 = vpop.f32.mrf.mxu0
        %v1432 = vadd.f32 %v1359, %v1431
        %1433 = vdwg.mxu0
        %1434 = vmatprep.subr.bf16.mxu0 %v1175
        %1435 = vmatpush1.bf16.msra.mxu0 %v1174
        %1436 = vmatprep.subr.bf16.mxu0 %v1173
        %1437 = vmatpush1.bf16.msra.mxu0 %v1172
        %1438 = vmatprep.subr.bf16.mxu0 %v1171
        %1439 = vmatpush1.bf16.msra.mxu0 %v1170
        %1440 = vmatprep.subr.bf16.mxu0 %v1169
        %1441 = vmatpush1.bf16.msra.mxu0 %v1168
        %1442 = vmatprep.subr.bf16.mxu0 %v1167
        %1443 = vmatpush1.bf16.msra.mxu0 %v1166
        %1444 = vmatprep.subr.bf16.mxu0 %v1165
        %1445 = vmatpush1.bf16.msra.mxu0 %v1164
        %1446 = vmatprep.subr.bf16.mxu0 %v1163
        %1447 = vmatpush1.bf16.msra.mxu0 %v1162
        %1448 = vmatprep.subr.bf16.mxu0 %v1161
        %1449 = vmatpush1.bf16.msra.mxu0 %v1160
        %1450 = vmatprep.subr.bf16.mxu0 %v1191
        %1451 = vmatpush2.bf16.msra.mxu0 %v1190
        %1452 = vmatprep.subr.bf16.mxu0 %v1189
        %1453 = vmatpush2.bf16.msra.mxu0 %v1188
        %1454 = vmatprep.subr.bf16.mxu0 %v1187
        %1455 = vmatpush2.bf16.msra.mxu0 %v1186
        %1456 = vmatprep.subr.bf16.mxu0 %v1185
        %1457 = vmatpush2.bf16.msra.mxu0 %v1184
        %1458 = vmatprep.subr.bf16.mxu0 %v1183
        %1459 = vmatpush2.bf16.msra.mxu0 %v1182
        %1460 = vmatprep.subr.bf16.mxu0 %v1181
        %1461 = vmatpush2.bf16.msra.mxu0 %v1180
        %1462 = vmatprep.subr.bf16.mxu0 %v1179
        %1463 = vmatpush2.bf16.msra.mxu0 %v1178
        %1464 = vmatprep.subr.bf16.mxu0 %v1177
        %1465 = vmatpush2.bf16.msra.mxu0 %v1176
        %1466 = vmatprep.mubr.bf16.mxu0 %v682
        %1467 = vmatmul.mubr.bf16.gmra.mxu0 %v681
        %v1468 = vpop.f32.mrf.mxu0
        %v1469 = vadd.f32 %v1396, %v1468
        %v1470 = vpop.f32.mrf.mxu0
        %v1471 = vadd.f32 %v1398, %v1470
        %v1472 = vpop.f32.mrf.mxu0
        %v1473 = vadd.f32 %v1400, %v1472
        %v1474 = vpop.f32.mrf.mxu0
        %v1475 = vadd.f32 %v1402, %v1474
        %1476 = vmatprep.mubr.bf16.mxu0 %v688
        %1477 = vmatmul.mubr.bf16.gmra.mxu0 %v687
        %v1478 = vpop.f32.mrf.mxu0
        %v1479 = vadd.f32 %v1406, %v1478
        %v1480 = vpop.f32.mrf.mxu0
        %v1481 = vadd.f32 %v1408, %v1480
        %v1482 = vpop.f32.mrf.mxu0
        %v1483 = vadd.f32 %v1410, %v1482
        %v1484 = vpop.f32.mrf.mxu0
        %v1485 = vadd.f32 %v1412, %v1484
        %1486 = vmatprep.mubr.bf16.mxu0 %v694
        %1487 = vmatmul.mubr.bf16.gmra.mxu0 %v693
        %v1488 = vpop.f32.mrf.mxu0
        %v1489 = vadd.f32 %v1416, %v1488
        %v1490 = vpop.f32.mrf.mxu0
        %v1491 = vadd.f32 %v1418, %v1490
        %v1492 = vpop.f32.mrf.mxu0
        %v1493 = vadd.f32 %v1420, %v1492
        %v1494 = vpop.f32.mrf.mxu0
        %v1495 = vadd.f32 %v1422, %v1494
        %1496 = vmatprep.mubr.bf16.mxu0 %v700
        %1497 = vmatmul.mubr.bf16.gmra.mxu0 %v699
        %v1498 = vpop.f32.mrf.mxu0
        %v1499 = vadd.f32 %v1426, %v1498
        %v1500 = vpop.f32.mrf.mxu0
        %v1501 = vadd.f32 %v1428, %v1500
        %v1502 = vpop.f32.mrf.mxu0
        %v1503 = vadd.f32 %v1430, %v1502
        %v1504 = vpop.f32.mrf.mxu0
        %v1505 = vadd.f32 %v1432, %v1504
        %1506 = vdwg.mxu0
        %v1507 = vmax.f32 %v1469, 0.0
        %v1508 = vmax.f32 %v1471, 0.0
        %v1509 = vmax.f32 %v1473, 0.0
        %v1510 = vmax.f32 %v1475, 0.0
        %v1511 = vmax.f32 %v1479, 0.0
        %v1512 = vmax.f32 %v1481, 0.0
        %v1513 = vmax.f32 %v1483, 0.0
        %v1514 = vmax.f32 %v1485, 0.0
        %v1515 = vmax.f32 %v1489, 0.0
        %v1516 = vmax.f32 %v1491, 0.0
        %v1517 = vmax.f32 %v1493, 0.0
        %v1518 = vmax.f32 %v1495, 0.0
        %v1519 = vmax.f32 %v1499, 0.0
        %v1520 = vmax.f32 %v1501, 0.0
        %v1521 = vmax.f32 %v1503, 0.0
        %v1522 = vmax.f32 %v1505, 0.0
        %v1523 = vrot.slane %v1507, 1
        %v1524 = vrot.slane %v1508, 1
        %v1525 = vrot.slane %v1509, 1
        %v1526 = vrot.slane %v1510, 1
        %v1527 = vrot.slane %v1511, 1
        %v1528 = vrot.slane %v1512, 1
        %v1529 = vrot.slane %v1513, 1
        %v1530 = vrot.slane %v1514, 1
        %v1531 = vrot.slane %v1515, 1
        %v1532 = vrot.slane %v1516, 1
        %v1533 = vrot.slane %v1517, 1
        %v1534 = vrot.slane %v1518, 1
        %v1535 = vrot.slane %v1519, 1
        %v1536 = vrot.slane %v1520, 1
        %v1537 = vrot.slane %v1521, 1
        %v1538 = vrot.slane %v1522, 1
        %v1539 = vsel %vm454, %v1535, %v1537
        %v1540 = vsel %vm454, %v1536, %v1538
        %v1541 = vsel %vm454, %v1533, %v1535
        %v1542 = vsel %vm454, %v1534, %v1536
        %v1543 = vsel %vm454, %v1531, %v1533
        %v1544 = vsel %vm454, %v1532, %v1534
        %v1545 = vsel %vm454, %v1529, %v1531
        %v1546 = vsel %vm454, %v1530, %v1532
        %v1547 = vsel %vm454, %v1527, %v1529
        %v1548 = vsel %vm454, %v1528, %v1530
        %v1549 = vsel %vm454, %v1525, %v1527
        %v1550 = vsel %vm454, %v1526, %v1528
        %v1551 = vsel %vm454, %v1523, %v1525
        %v1552 = vsel %vm454, %v1524, %v1526
        %v1553 = vsel %vm454, %v1537, %v1523
        %v1554 = vsel %vm454, %v1538, %v1524
        %v1555 = vrot.slane %v1507, 2
        %v1556 = vrot.slane %v1508, 2
        %v1557 = vrot.slane %v1509, 2
        %v1558 = vrot.slane %v1510, 2
        %v1559 = vrot.slane %v1511, 2
        %v1560 = vrot.slane %v1512, 2
        %v1561 = vrot.slane %v1513, 2
        %v1562 = vrot.slane %v1514, 2
        %v1563 = vrot.slane %v1515, 2
        %v1564 = vrot.slane %v1516, 2
        %v1565 = vrot.slane %v1517, 2
        %v1566 = vrot.slane %v1518, 2
        %v1567 = vrot.slane %v1519, 2
        %v1568 = vrot.slane %v1520, 2
        %v1569 = vrot.slane %v1521, 2
        %v1570 = vrot.slane %v1522, 2
        %v1571 = vsel %vm537, %v1567, %v1569
        %v1572 = vsel %vm537, %v1568, %v1570
        %v1573 = vsel %vm537, %v1565, %v1567
        %v1574 = vsel %vm537, %v1566, %v1568
        %v1575 = vsel %vm537, %v1563, %v1565
        %v1576 = vsel %vm537, %v1564, %v1566
        %v1577 = vsel %vm537, %v1561, %v1563
        %v1578 = vsel %vm537, %v1562, %v1564
        %v1579 = vsel %vm537, %v1559, %v1561
        %v1580 = vsel %vm537, %v1560, %v1562
        %v1581 = vsel %vm537, %v1557, %v1559
        %v1582 = vsel %vm537, %v1558, %v1560
        %v1583 = vsel %vm537, %v1555, %v1557
        %v1584 = vsel %vm537, %v1556, %v1558
        %v1585 = vsel %vm537, %v1569, %v1555
        %v1586 = vsel %vm537, %v1570, %v1556
        %v1587 = vpack.c.bf16 %v1509, %v1507
        %v1588 = vpack.c.bf16 %v1510, %v1508
        %v1589 = vpack.c.bf16 %v1549, %v1551
        %v1590 = vpack.c.bf16 %v1550, %v1552
        %v1591 = vpack.c.bf16 %v1581, %v1583
        %v1592 = vpack.c.bf16 %v1582, %v1584
        %v1593 = vpack.c.bf16 %v1517, %v1515
        %v1594 = vpack.c.bf16 %v1518, %v1516
        %v1595 = vpack.c.bf16 %v1541, %v1543
        %v1596 = vpack.c.bf16 %v1542, %v1544
        %v1597 = vpack.c.bf16 %v1573, %v1575
        %v1598 = vpack.c.bf16 %v1574, %v1576
        %v1599 = vpack.c.bf16 %v1513, %v1511
        %v1600 = vpack.c.bf16 %v1514, %v1512
        %v1601 = vpack.c.bf16 %v1545, %v1547
        %v1602 = vpack.c.bf16 %v1546, %v1548
        %v1603 = vpack.c.bf16 %v1577, %v1579
        %v1604 = vpack.c.bf16 %v1578, %v1580
        %v1605 = vpack.c.bf16 %v1521, %v1519
        %v1606 = vpack.c.bf16 %v1522, %v1520
        %v1607 = vpack.c.bf16 %v1553, %v1539
        %v1608 = vpack.c.bf16 %v1554, %v1540
        %v1609 = vpack.c.bf16 %v1585, %v1571
        %v1610 = vpack.c.bf16 %v1586, %v1572
        %v1611 = vld [vmem:[#allocation4] sm:$0xf]
        %v1612 = vld [vmem:[#allocation4 + $0x4] sm:$0xf]
        %v1613 = vld [vmem:[#allocation4 + $0x8] sm:$0xf]
        %v1614 = vld [vmem:[#allocation4 + $0xc] sm:$0xf]
        %v1615 = vld [vmem:[#allocation4 + $0x10] sm:$0xf]
        %v1616 = vld [vmem:[#allocation4 + $0x14] sm:$0xf]
        %v1617 = vld [vmem:[#allocation4 + $0x18] sm:$0xf]
        %v1618 = vld [vmem:[#allocation4 + $0x1c] sm:$0xf]
        %v1619 = vld [vmem:[#allocation4 + $0x20] sm:$0xf]
        %v1620 = vld [vmem:[#allocation4 + $0x24] sm:$0xf]
        %v1621 = vld [vmem:[#allocation4 + $0x28] sm:$0xf]
        %v1622 = vld [vmem:[#allocation4 + $0x2c] sm:$0xf]
        %v1623 = vld [vmem:[#allocation4 + $0x30] sm:$0xf]
        %v1624 = vld [vmem:[#allocation4 + $0x34] sm:$0xf]
        %v1625 = vld [vmem:[#allocation4 + $0x38] sm:$0xf]
        %v1626 = vld [vmem:[#allocation4 + $0x3c] sm:$0xf]
        %v1627 = vld [vmem:[#allocation4 + $0x40] sm:$0xf]
        %v1628 = vld [vmem:[#allocation4 + $0x44] sm:$0xf]
        %v1629 = vld [vmem:[#allocation4 + $0x48] sm:$0xf]
        %v1630 = vld [vmem:[#allocation4 + $0x4c] sm:$0xf]
        %v1631 = vld [vmem:[#allocation4 + $0x50] sm:$0xf]
        %v1632 = vld [vmem:[#allocation4 + $0x54] sm:$0xf]
        %v1633 = vld [vmem:[#allocation4 + $0x58] sm:$0xf]
        %v1634 = vld [vmem:[#allocation4 + $0x5c] sm:$0xf]
        %v1635 = vld [vmem:[#allocation4 + $0x60] sm:$0xf]
        %v1636 = vld [vmem:[#allocation4 + $0x64] sm:$0xf]
        %v1637 = vld [vmem:[#allocation4 + $0x68] sm:$0xf]
        %v1638 = vld [vmem:[#allocation4 + $0x6c] sm:$0xf]
        %v1639 = vld [vmem:[#allocation4 + $0x70] sm:$0xf]
        %v1640 = vld [vmem:[#allocation4 + $0x74] sm:$0xf]
        %v1641 = vld [vmem:[#allocation4 + $0x78] sm:$0xf]
        %v1642 = vld [vmem:[#allocation4 + $0x7c] sm:$0xf]
        %v1643 = vld [vmem:[#allocation4 + $0x80] sm:$0xf]
        %v1644 = vld [vmem:[#allocation4 + $0x84] sm:$0xf]
        %v1645 = vld [vmem:[#allocation4 + $0x88] sm:$0xf]
        %v1646 = vld [vmem:[#allocation4 + $0x8c] sm:$0xf]
        %v1647 = vld [vmem:[#allocation4 + $0x90] sm:$0xf]
        %v1648 = vld [vmem:[#allocation4 + $0x94] sm:$0xf]
        %v1649 = vld [vmem:[#allocation4 + $0x98] sm:$0xf]
        %v1650 = vld [vmem:[#allocation4 + $0x9c] sm:$0xf]
        %v1651 = vld [vmem:[#allocation4 + $0xa0] sm:$0xf]
        %v1652 = vld [vmem:[#allocation4 + $0xa4] sm:$0xf]
        %v1653 = vld [vmem:[#allocation4 + $0xa8] sm:$0xf]
        %v1654 = vld [vmem:[#allocation4 + $0xac] sm:$0xf]
        %v1655 = vld [vmem:[#allocation4 + $0xb0] sm:$0xf]
        %v1656 = vld [vmem:[#allocation4 + $0xb4] sm:$0xf]
        %v1657 = vld [vmem:[#allocation4 + $0xb8] sm:$0xf]
        %v1658 = vld [vmem:[#allocation4 + $0xbc] sm:$0xf]
        %v1659 = vld [vmem:[#allocation4 + $0xc0] sm:$0xf]
        %v1660 = vld [vmem:[#allocation4 + $0xc4] sm:$0xf]
        %v1661 = vld [vmem:[#allocation4 + $0xc8] sm:$0xf]
        %v1662 = vld [vmem:[#allocation4 + $0xcc] sm:$0xf]
        %v1663 = vld [vmem:[#allocation4 + $0xd0] sm:$0xf]
        %v1664 = vld [vmem:[#allocation4 + $0xd4] sm:$0xf]
        %v1665 = vld [vmem:[#allocation4 + $0xd8] sm:$0xf]
        %v1666 = vld [vmem:[#allocation4 + $0xdc] sm:$0xf]
        %v1667 = vld [vmem:[#allocation4 + $0xe0] sm:$0xf]
        %v1668 = vld [vmem:[#allocation4 + $0xe4] sm:$0xf]
        %v1669 = vld [vmem:[#allocation4 + $0xe8] sm:$0xf]
        %v1670 = vld [vmem:[#allocation4 + $0xec] sm:$0xf]
        %v1671 = vld [vmem:[#allocation4 + $0xf0] sm:$0xf]
        %v1672 = vld [vmem:[#allocation4 + $0xf4] sm:$0xf]
        %v1673 = vld [vmem:[#allocation4 + $0xf8] sm:$0xf]
        %v1674 = vld [vmem:[#allocation4 + $0xfc] sm:$0xf]
        %v1675 = vld [vmem:[#allocation4 + $0x100] sm:$0xf]
        %v1676 = vld [vmem:[#allocation4 + $0x104] sm:$0xf]
        %v1677 = vld [vmem:[#allocation4 + $0x108] sm:$0xf]
        %v1678 = vld [vmem:[#allocation4 + $0x10c] sm:$0xf]
        %v1679 = vld [vmem:[#allocation4 + $0x110] sm:$0xf]
        %v1680 = vld [vmem:[#allocation4 + $0x114] sm:$0xf]
        %v1681 = vld [vmem:[#allocation4 + $0x118] sm:$0xf]
        %v1682 = vld [vmem:[#allocation4 + $0x11c] sm:$0xf]
        %v1683 = vld [vmem:[#allocation4 + $0x120] sm:$0xf]
        %v1684 = vld [vmem:[#allocation4 + $0x124] sm:$0xf]
        %v1685 = vld [vmem:[#allocation4 + $0x128] sm:$0xf]
        %v1686 = vld [vmem:[#allocation4 + $0x12c] sm:$0xf]
        %v1687 = vld [vmem:[#allocation4 + $0x130] sm:$0xf]
        %v1688 = vld [vmem:[#allocation4 + $0x134] sm:$0xf]
        %v1689 = vld [vmem:[#allocation4 + $0x138] sm:$0xf]
        %v1690 = vld [vmem:[#allocation4 + $0x13c] sm:$0xf]
        %v1691 = vld [vmem:[#allocation4 + $0x140] sm:$0xf]
        %v1692 = vld [vmem:[#allocation4 + $0x144] sm:$0xf]
        %v1693 = vld [vmem:[#allocation4 + $0x148] sm:$0xf]
        %v1694 = vld [vmem:[#allocation4 + $0x14c] sm:$0xf]
        %v1695 = vld [vmem:[#allocation4 + $0x150] sm:$0xf]
        %v1696 = vld [vmem:[#allocation4 + $0x154] sm:$0xf]
        %v1697 = vld [vmem:[#allocation4 + $0x158] sm:$0xf]
        %v1698 = vld [vmem:[#allocation4 + $0x15c] sm:$0xf]
        %v1699 = vld [vmem:[#allocation4 + $0x160] sm:$0xf]
        %v1700 = vld [vmem:[#allocation4 + $0x164] sm:$0xf]
        %v1701 = vld [vmem:[#allocation4 + $0x168] sm:$0xf]
        %v1702 = vld [vmem:[#allocation4 + $0x16c] sm:$0xf]
        %v1703 = vld [vmem:[#allocation4 + $0x170] sm:$0xf]
        %v1704 = vld [vmem:[#allocation4 + $0x174] sm:$0xf]
        %v1705 = vld [vmem:[#allocation4 + $0x178] sm:$0xf]
        %v1706 = vld [vmem:[#allocation4 + $0x17c] sm:$0xf]
        %v1707 = vld [vmem:[#allocation4 + $0x180] sm:$0xf]
        %v1708 = vld [vmem:[#allocation4 + $0x184] sm:$0xf]
        %v1709 = vld [vmem:[#allocation4 + $0x188] sm:$0xf]
        %v1710 = vld [vmem:[#allocation4 + $0x18c] sm:$0xf]
        %v1711 = vld [vmem:[#allocation4 + $0x190] sm:$0xf]
        %v1712 = vld [vmem:[#allocation4 + $0x194] sm:$0xf]
        %v1713 = vld [vmem:[#allocation4 + $0x198] sm:$0xf]
        %v1714 = vld [vmem:[#allocation4 + $0x19c] sm:$0xf]
        %v1715 = vld [vmem:[#allocation4 + $0x1a0] sm:$0xf]
        %v1716 = vld [vmem:[#allocation4 + $0x1a4] sm:$0xf]
        %v1717 = vld [vmem:[#allocation4 + $0x1a8] sm:$0xf]
        %v1718 = vld [vmem:[#allocation4 + $0x1ac] sm:$0xf]
        %v1719 = vld [vmem:[#allocation4 + $0x1b0] sm:$0xf]
        %v1720 = vld [vmem:[#allocation4 + $0x1b4] sm:$0xf]
        %v1721 = vld [vmem:[#allocation4 + $0x1b8] sm:$0xf]
        %v1722 = vld [vmem:[#allocation4 + $0x1bc] sm:$0xf]
        %v1723 = vld [vmem:[#allocation4 + $0x1c0] sm:$0xf]
        %v1724 = vld [vmem:[#allocation4 + $0x1c4] sm:$0xf]
        %v1725 = vld [vmem:[#allocation4 + $0x1c8] sm:$0xf]
        %v1726 = vld [vmem:[#allocation4 + $0x1cc] sm:$0xf]
        %v1727 = vld [vmem:[#allocation4 + $0x1d0] sm:$0xf]
        %v1728 = vld [vmem:[#allocation4 + $0x1d4] sm:$0xf]
        %v1729 = vld [vmem:[#allocation4 + $0x1d8] sm:$0xf]
        %v1730 = vld [vmem:[#allocation4 + $0x1dc] sm:$0xf]
        %v1731 = vld [vmem:[#allocation4 + $0x1e0] sm:$0xf]
        %v1732 = vld [vmem:[#allocation4 + $0x1e4] sm:$0xf]
        %v1733 = vld [vmem:[#allocation4 + $0x1e8] sm:$0xf]
        %v1734 = vld [vmem:[#allocation4 + $0x1ec] sm:$0xf]
        %v1735 = vld [vmem:[#allocation4 + $0x1f0] sm:$0xf]
        %v1736 = vld [vmem:[#allocation4 + $0x1f4] sm:$0xf]
        %v1737 = vld [vmem:[#allocation4 + $0x1f8] sm:$0xf]
        %v1738 = vld [vmem:[#allocation4 + $0x1fc] sm:$0xf]
        %v1739 = vld [vmem:[#allocation4 + $0x200] sm:$0xf]
        %v1740 = vld [vmem:[#allocation4 + $0x204] sm:$0xf]
        %v1741 = vld [vmem:[#allocation4 + $0x208] sm:$0xf]
        %v1742 = vld [vmem:[#allocation4 + $0x20c] sm:$0xf]
        %v1743 = vld [vmem:[#allocation4 + $0x210] sm:$0xf]
        %v1744 = vld [vmem:[#allocation4 + $0x214] sm:$0xf]
        %v1745 = vld [vmem:[#allocation4 + $0x218] sm:$0xf]
        %v1746 = vld [vmem:[#allocation4 + $0x21c] sm:$0xf]
        %v1747 = vld [vmem:[#allocation4 + $0x220] sm:$0xf]
        %v1748 = vld [vmem:[#allocation4 + $0x224] sm:$0xf]
        %v1749 = vld [vmem:[#allocation4 + $0x228] sm:$0xf]
        %v1750 = vld [vmem:[#allocation4 + $0x22c] sm:$0xf]
        %v1751 = vld [vmem:[#allocation4 + $0x230] sm:$0xf]
        %v1752 = vld [vmem:[#allocation4 + $0x234] sm:$0xf]
        %v1753 = vld [vmem:[#allocation4 + $0x238] sm:$0xf]
        %v1754 = vld [vmem:[#allocation4 + $0x23c] sm:$0xf]
        %v1755 = vld [vmem:[#allocation4 + $0x240] sm:$0xf]
        %v1756 = vld [vmem:[#allocation4 + $0x244] sm:$0xf]
        %v1757 = vld [vmem:[#allocation4 + $0x248] sm:$0xf]
        %v1758 = vld [vmem:[#allocation4 + $0x24c] sm:$0xf]
        %v1759 = vld [vmem:[#allocation4 + $0x250] sm:$0xf]
        %v1760 = vld [vmem:[#allocation4 + $0x254] sm:$0xf]
        %v1761 = vld [vmem:[#allocation4 + $0x258] sm:$0xf]
        %v1762 = vld [vmem:[#allocation4 + $0x25c] sm:$0xf]
        %v1763 = vld [vmem:[#allocation4 + $0x260] sm:$0xf]
        %v1764 = vld [vmem:[#allocation4 + $0x264] sm:$0xf]
        %v1765 = vld [vmem:[#allocation4 + $0x268] sm:$0xf]
        %v1766 = vld [vmem:[#allocation4 + $0x26c] sm:$0xf]
        %v1767 = vld [vmem:[#allocation4 + $0x270] sm:$0xf]
        %v1768 = vld [vmem:[#allocation4 + $0x274] sm:$0xf]
        %v1769 = vld [vmem:[#allocation4 + $0x278] sm:$0xf]
        %v1770 = vld [vmem:[#allocation4 + $0x27c] sm:$0xf]
        %v1771 = vld [vmem:[#allocation4 + $0x280] sm:$0xf]
        %v1772 = vld [vmem:[#allocation4 + $0x284] sm:$0xf]
        %v1773 = vld [vmem:[#allocation4 + $0x288] sm:$0xf]
        %v1774 = vld [vmem:[#allocation4 + $0x28c] sm:$0xf]
        %v1775 = vld [vmem:[#allocation4 + $0x290] sm:$0xf]
        %v1776 = vld [vmem:[#allocation4 + $0x294] sm:$0xf]
        %v1777 = vld [vmem:[#allocation4 + $0x298] sm:$0xf]
        %v1778 = vld [vmem:[#allocation4 + $0x29c] sm:$0xf]
        %v1779 = vld [vmem:[#allocation4 + $0x2a0] sm:$0xf]
        %v1780 = vld [vmem:[#allocation4 + $0x2a4] sm:$0xf]
        %v1781 = vld [vmem:[#allocation4 + $0x2a8] sm:$0xf]
        %v1782 = vld [vmem:[#allocation4 + $0x2ac] sm:$0xf]
        %v1783 = vld [vmem:[#allocation4 + $0x2b0] sm:$0xf]
        %v1784 = vld [vmem:[#allocation4 + $0x2b4] sm:$0xf]
        %v1785 = vld [vmem:[#allocation4 + $0x2b8] sm:$0xf]
        %v1786 = vld [vmem:[#allocation4 + $0x2bc] sm:$0xf]
        %v1787 = vld [vmem:[#allocation4 + $0x2c0] sm:$0xf]
        %v1788 = vld [vmem:[#allocation4 + $0x2c4] sm:$0xf]
        %v1789 = vld [vmem:[#allocation4 + $0x2c8] sm:$0xf]
        %v1790 = vld [vmem:[#allocation4 + $0x2cc] sm:$0xf]
        %v1791 = vld [vmem:[#allocation4 + $0x2d0] sm:$0xf]
        %v1792 = vld [vmem:[#allocation4 + $0x2d4] sm:$0xf]
        %v1793 = vld [vmem:[#allocation4 + $0x2d8] sm:$0xf]
        %v1794 = vld [vmem:[#allocation4 + $0x2dc] sm:$0xf]
        %v1795 = vld [vmem:[#allocation4 + $0x2e0] sm:$0xf]
        %v1796 = vld [vmem:[#allocation4 + $0x2e4] sm:$0xf]
        %v1797 = vld [vmem:[#allocation4 + $0x2e8] sm:$0xf]
        %v1798 = vld [vmem:[#allocation4 + $0x2ec] sm:$0xf]
        %v1799 = vld [vmem:[#allocation4 + $0x2f0] sm:$0xf]
        %v1800 = vld [vmem:[#allocation4 + $0x2f4] sm:$0xf]
        %v1801 = vld [vmem:[#allocation4 + $0x2f8] sm:$0xf]
        %v1802 = vld [vmem:[#allocation4 + $0x2fc] sm:$0xf]
        %v1804 = vlaneseq
        %v1805 = vshrl.u32 %v1804, 7
        %v1806 = vsub.s32 0, %v1805
        %v1807 = vrot.slane %v322, %v1806
        %v2001 = vunpack.c.l.b16 %v1611
        %v2002 = vunpack.c.l.b16 %v1612
        %v2003 = vunpack.c.l.b16 %v1613
        %v2004 = vunpack.c.l.b16 %v1614
        %v2005 = vunpack.c.l.b16 %v1615
        %v2006 = vunpack.c.l.b16 %v1616
        %v2007 = vunpack.c.l.b16 %v1617
        %v2008 = vunpack.c.l.b16 %v1618
        %v2009 = vunpack.c.l.b16 %v1619
        %v2010 = vunpack.c.l.b16 %v1620
        %v2011 = vunpack.c.l.b16 %v1621
        %v2012 = vunpack.c.l.b16 %v1622
        %v2013 = vunpack.c.l.b16 %v1623
        %v2014 = vunpack.c.l.b16 %v1624
        %v2015 = vunpack.c.l.b16 %v1625
        %v2016 = vunpack.c.l.b16 %v1626
        %v2017 = vunpack.c.l.b16 %v1627
        %v2018 = vunpack.c.l.b16 %v1628
        %v2019 = vunpack.c.l.b16 %v1629
        %v2020 = vunpack.c.l.b16 %v1630
        %v2021 = vunpack.c.l.b16 %v1631
        %v2022 = vunpack.c.l.b16 %v1632
        %v2023 = vunpack.c.l.b16 %v1633
        %v2024 = vunpack.c.l.b16 %v1634
        %v2025 = vunpack.c.l.b16 %v1635
        %v2026 = vunpack.c.l.b16 %v1636
        %v2027 = vunpack.c.l.b16 %v1637
        %v2028 = vunpack.c.l.b16 %v1638
        %v2029 = vunpack.c.l.b16 %v1639
        %v2030 = vunpack.c.l.b16 %v1640
        %v2031 = vunpack.c.l.b16 %v1641
        %v2032 = vunpack.c.l.b16 %v1642
        %v2033 = vunpack.c.l.b16 %v1643
        %v2034 = vunpack.c.l.b16 %v1644
        %v2035 = vunpack.c.l.b16 %v1645
        %v2036 = vunpack.c.l.b16 %v1646
        %v2037 = vunpack.c.l.b16 %v1647
        %v2038 = vunpack.c.l.b16 %v1648
        %v2039 = vunpack.c.l.b16 %v1649
        %v2040 = vunpack.c.l.b16 %v1650
        %v2041 = vunpack.c.l.b16 %v1651
        %v2042 = vunpack.c.l.b16 %v1652
        %v2043 = vunpack.c.l.b16 %v1653
        %v2044 = vunpack.c.l.b16 %v1654
        %v2045 = vunpack.c.l.b16 %v1655
        %v2046 = vunpack.c.l.b16 %v1656
        %v2047 = vunpack.c.l.b16 %v1657
        %v2048 = vunpack.c.l.b16 %v1658
        %v2049 = vunpack.c.l.b16 %v1659
        %v2050 = vunpack.c.l.b16 %v1660
        %v2051 = vunpack.c.l.b16 %v1661
        %v2052 = vunpack.c.l.b16 %v1662
        %v2053 = vunpack.c.l.b16 %v1663
        %v2054 = vunpack.c.l.b16 %v1664
        %v2055 = vunpack.c.l.b16 %v1665
        %v2056 = vunpack.c.l.b16 %v1666
        %v2057 = vunpack.c.l.b16 %v1667
        %v2058 = vunpack.c.l.b16 %v1668
        %v2059 = vunpack.c.l.b16 %v1669
        %v2060 = vunpack.c.l.b16 %v1670
        %v2061 = vunpack.c.l.b16 %v1671
        %v2062 = vunpack.c.l.b16 %v1672
        %v2063 = vunpack.c.l.b16 %v1673
        %v2064 = vunpack.c.l.b16 %v1674
        %v2065 = vunpack.c.l.b16 %v1675
        %v2066 = vunpack.c.l.b16 %v1676
        %v2067 = vunpack.c.l.b16 %v1677
        %v2068 = vunpack.c.l.b16 %v1678
        %v2069 = vunpack.c.l.b16 %v1679
        %v2070 = vunpack.c.l.b16 %v1680
        %v2071 = vunpack.c.l.b16 %v1681
        %v2072 = vunpack.c.l.b16 %v1682
        %v2073 = vunpack.c.l.b16 %v1683
        %v2074 = vunpack.c.l.b16 %v1684
        %v2075 = vunpack.c.l.b16 %v1685
        %v2076 = vunpack.c.l.b16 %v1686
        %v2077 = vunpack.c.l.b16 %v1687
        %v2078 = vunpack.c.l.b16 %v1688
        %v2079 = vunpack.c.l.b16 %v1689
        %v2080 = vunpack.c.l.b16 %v1690
        %v2081 = vunpack.c.l.b16 %v1691
        %v2082 = vunpack.c.l.b16 %v1692
        %v2083 = vunpack.c.l.b16 %v1693
        %v2084 = vunpack.c.l.b16 %v1694
        %v2085 = vunpack.c.l.b16 %v1695
        %v2086 = vunpack.c.l.b16 %v1696
        %v2087 = vunpack.c.l.b16 %v1697
        %v2088 = vunpack.c.l.b16 %v1698
        %v2089 = vunpack.c.l.b16 %v1699
        %v2090 = vunpack.c.l.b16 %v1700
        %v2091 = vunpack.c.l.b16 %v1701
        %v2092 = vunpack.c.l.b16 %v1702
        %v2093 = vunpack.c.l.b16 %v1703
        %v2094 = vunpack.c.l.b16 %v1704
        %v2095 = vunpack.c.l.b16 %v1705
        %v2096 = vunpack.c.l.b16 %v1706
        %v2097 = vunpack.c.l.b16 %v1707
        %v2098 = vunpack.c.l.b16 %v1708
        %v2099 = vunpack.c.l.b16 %v1709
        %v2100 = vunpack.c.l.b16 %v1710
        %v2101 = vunpack.c.l.b16 %v1711
        %v2102 = vunpack.c.l.b16 %v1712
        %v2103 = vunpack.c.l.b16 %v1713
        %v2104 = vunpack.c.l.b16 %v1714
        %v2105 = vunpack.c.l.b16 %v1715
        %v2106 = vunpack.c.l.b16 %v1716
        %v2107 = vunpack.c.l.b16 %v1717
        %v2108 = vunpack.c.l.b16 %v1718
        %v2109 = vunpack.c.l.b16 %v1719
        %v2110 = vunpack.c.l.b16 %v1720
        %v2111 = vunpack.c.l.b16 %v1721
        %v2112 = vunpack.c.l.b16 %v1722
        %v2113 = vunpack.c.l.b16 %v1723
        %v2114 = vunpack.c.l.b16 %v1724
        %v2115 = vunpack.c.l.b16 %v1725
        %v2116 = vunpack.c.l.b16 %v1726
        %v2117 = vunpack.c.l.b16 %v1727
        %v2118 = vunpack.c.l.b16 %v1728
        %v2119 = vunpack.c.l.b16 %v1729
        %v2120 = vunpack.c.l.b16 %v1730
        %v2121 = vunpack.c.l.b16 %v1731
        %v2122 = vunpack.c.l.b16 %v1732
        %v2123 = vunpack.c.l.b16 %v1733
        %v2124 = vunpack.c.l.b16 %v1734
        %v2125 = vunpack.c.l.b16 %v1735
        %v2126 = vunpack.c.l.b16 %v1736
        %v2127 = vunpack.c.l.b16 %v1737
        %v2128 = vunpack.c.l.b16 %v1738
        %v2129 = vunpack.c.l.b16 %v1739
        %v2130 = vunpack.c.l.b16 %v1740
        %v2131 = vunpack.c.l.b16 %v1741
        %v2132 = vunpack.c.l.b16 %v1742
        %v2133 = vunpack.c.l.b16 %v1743
        %v2134 = vunpack.c.l.b16 %v1744
        %v2135 = vunpack.c.l.b16 %v1745
        %v2136 = vunpack.c.l.b16 %v1746
        %v2137 = vunpack.c.l.b16 %v1747
        %v2138 = vunpack.c.l.b16 %v1748
        %v2139 = vunpack.c.l.b16 %v1749
        %v2140 = vunpack.c.l.b16 %v1750
        %v2141 = vunpack.c.l.b16 %v1751
        %v2142 = vunpack.c.l.b16 %v1752
        %v2143 = vunpack.c.l.b16 %v1753
        %v2144 = vunpack.c.l.b16 %v1754
        %v2145 = vunpack.c.l.b16 %v1755
        %v2146 = vunpack.c.l.b16 %v1756
        %v2147 = vunpack.c.l.b16 %v1757
        %v2148 = vunpack.c.l.b16 %v1758
        %v2149 = vunpack.c.l.b16 %v1759
        %v2150 = vunpack.c.l.b16 %v1760
        %v2151 = vunpack.c.l.b16 %v1761
        %v2152 = vunpack.c.l.b16 %v1762
        %v2153 = vunpack.c.l.b16 %v1763
        %v2154 = vunpack.c.l.b16 %v1764
        %v2155 = vunpack.c.l.b16 %v1765
        %v2156 = vunpack.c.l.b16 %v1766
        %v2157 = vunpack.c.l.b16 %v1767
        %v2158 = vunpack.c.l.b16 %v1768
        %v2159 = vunpack.c.l.b16 %v1769
        %v2160 = vunpack.c.l.b16 %v1770
        %v2161 = vunpack.c.l.b16 %v1771
        %v2162 = vunpack.c.l.b16 %v1772
        %v2163 = vunpack.c.l.b16 %v1773
        %v2164 = vunpack.c.l.b16 %v1774
        %v2165 = vunpack.c.l.b16 %v1775
        %v2166 = vunpack.c.l.b16 %v1776
        %v2167 = vunpack.c.l.b16 %v1777
        %v2168 = vunpack.c.l.b16 %v1778
        %v2169 = vunpack.c.l.b16 %v1779
        %v2170 = vunpack.c.l.b16 %v1780
        %v2171 = vunpack.c.l.b16 %v1781
        %v2172 = vunpack.c.l.b16 %v1782
        %v2173 = vunpack.c.l.b16 %v1783
        %v2174 = vunpack.c.l.b16 %v1784
        %v2175 = vunpack.c.l.b16 %v1785
        %v2176 = vunpack.c.l.b16 %v1786
        %v2177 = vunpack.c.l.b16 %v1787
        %v2178 = vunpack.c.l.b16 %v1788
        %v2179 = vunpack.c.l.b16 %v1789
        %v2180 = vunpack.c.l.b16 %v1790
        %v2181 = vunpack.c.l.b16 %v1791
        %v2182 = vunpack.c.l.b16 %v1792
        %v2183 = vunpack.c.l.b16 %v1793
        %v2184 = vunpack.c.l.b16 %v1794
        %v2185 = vunpack.c.l.b16 %v1795
        %v2186 = vunpack.c.l.b16 %v1796
        %v2187 = vunpack.c.l.b16 %v1797
        %v2188 = vunpack.c.l.b16 %v1798
        %v2189 = vunpack.c.l.b16 %v1799
        %v2190 = vunpack.c.l.b16 %v1800
        %v2191 = vunpack.c.l.b16 %v1801
        %v2192 = vunpack.c.l.b16 %v1802
        %v2193 = vpack.c.b16 %v2002, %v2001
        %v2194 = vpack.c.b16 %v2004, %v2003
        %v2195 = vpack.c.b16 %v2006, %v2005
        %v2196 = vpack.c.b16 %v2008, %v2007
        %v2197 = vpack.c.b16 %v2010, %v2009
        %v2198 = vpack.c.b16 %v2012, %v2011
        %v2199 = vpack.c.b16 %v2014, %v2013
        %v2200 = vpack.c.b16 %v2016, %v2015
        %v2201 = vpack.c.b16 %v2018, %v2017
        %v2202 = vpack.c.b16 %v2020, %v2019
        %v2203 = vpack.c.b16 %v2022, %v2021
        %v2204 = vpack.c.b16 %v2024, %v2023
        %v2205 = vpack.c.b16 %v2026, %v2025
        %v2206 = vpack.c.b16 %v2028, %v2027
        %v2207 = vpack.c.b16 %v2030, %v2029
        %v2208 = vpack.c.b16 %v2032, %v2031
        %v2209 = vpack.c.b16 %v2034, %v2033
        %v2210 = vpack.c.b16 %v2036, %v2035
        %v2211 = vpack.c.b16 %v2038, %v2037
        %v2212 = vpack.c.b16 %v2040, %v2039
        %v2213 = vpack.c.b16 %v2042, %v2041
        %v2214 = vpack.c.b16 %v2044, %v2043
        %v2215 = vpack.c.b16 %v2046, %v2045
        %v2216 = vpack.c.b16 %v2048, %v2047
        %v2217 = vpack.c.b16 %v2050, %v2049
        %v2218 = vpack.c.b16 %v2052, %v2051
        %v2219 = vpack.c.b16 %v2054, %v2053
        %v2220 = vpack.c.b16 %v2056, %v2055
        %v2221 = vpack.c.b16 %v2058, %v2057
        %v2222 = vpack.c.b16 %v2060, %v2059
        %v2223 = vpack.c.b16 %v2062, %v2061
        %v2224 = vpack.c.b16 %v2064, %v2063
        %v2225 = vpack.c.b16 %v2066, %v2065
        %v2226 = vpack.c.b16 %v2068, %v2067
        %v2227 = vpack.c.b16 %v2070, %v2069
        %v2228 = vpack.c.b16 %v2072, %v2071
        %v2229 = vpack.c.b16 %v2074, %v2073
        %v2230 = vpack.c.b16 %v2076, %v2075
        %v2231 = vpack.c.b16 %v2078, %v2077
        %v2232 = vpack.c.b16 %v2080, %v2079
        %v2233 = vpack.c.b16 %v2082, %v2081
        %v2234 = vpack.c.b16 %v2084, %v2083
        %v2235 = vpack.c.b16 %v2086, %v2085
        %v2236 = vpack.c.b16 %v2088, %v2087
        %v2237 = vpack.c.b16 %v2090, %v2089
        %v2238 = vpack.c.b16 %v2092, %v2091
        %v2239 = vpack.c.b16 %v2094, %v2093
        %v2240 = vpack.c.b16 %v2096, %v2095
        %v2241 = vpack.c.b16 %v2098, %v2097
        %v2242 = vpack.c.b16 %v2100, %v2099
        %v2243 = vpack.c.b16 %v2102, %v2101
        %v2244 = vpack.c.b16 %v2104, %v2103
        %v2245 = vpack.c.b16 %v2106, %v2105
        %v2246 = vpack.c.b16 %v2108, %v2107
        %v2247 = vpack.c.b16 %v2110, %v2109
        %v2248 = vpack.c.b16 %v2112, %v2111
        %v2249 = vpack.c.b16 %v2114, %v2113
        %v2250 = vpack.c.b16 %v2116, %v2115
        %v2251 = vpack.c.b16 %v2118, %v2117
        %v2252 = vpack.c.b16 %v2120, %v2119
        %v2253 = vpack.c.b16 %v2122, %v2121
        %v2254 = vpack.c.b16 %v2124, %v2123
        %v2255 = vpack.c.b16 %v2126, %v2125
        %v2256 = vpack.c.b16 %v2128, %v2127
        %v2257 = vpack.c.b16 %v2130, %v2129
        %v2258 = vpack.c.b16 %v2132, %v2131
        %v2259 = vpack.c.b16 %v2134, %v2133
        %v2260 = vpack.c.b16 %v2136, %v2135
        %v2261 = vpack.c.b16 %v2138, %v2137
        %v2262 = vpack.c.b16 %v2140, %v2139
        %v2263 = vpack.c.b16 %v2142, %v2141
        %v2264 = vpack.c.b16 %v2144, %v2143
        %v2265 = vpack.c.b16 %v2146, %v2145
        %v2266 = vpack.c.b16 %v2148, %v2147
        %v2267 = vpack.c.b16 %v2150, %v2149
        %v2268 = vpack.c.b16 %v2152, %v2151
        %v2269 = vpack.c.b16 %v2154, %v2153
        %v2270 = vpack.c.b16 %v2156, %v2155
        %v2271 = vpack.c.b16 %v2158, %v2157
        %v2272 = vpack.c.b16 %v2160, %v2159
        %v2273 = vpack.c.b16 %v2162, %v2161
        %v2274 = vpack.c.b16 %v2164, %v2163
        %v2275 = vpack.c.b16 %v2166, %v2165
        %v2276 = vpack.c.b16 %v2168, %v2167
        %v2277 = vpack.c.b16 %v2170, %v2169
        %v2278 = vpack.c.b16 %v2172, %v2171
        %v2279 = vpack.c.b16 %v2174, %v2173
        %v2280 = vpack.c.b16 %v2176, %v2175
        %v2281 = vpack.c.b16 %v2178, %v2177
        %v2282 = vpack.c.b16 %v2180, %v2179
        %v2283 = vpack.c.b16 %v2182, %v2181
        %v2284 = vpack.c.b16 %v2184, %v2183
        %v2285 = vpack.c.b16 %v2186, %v2185
        %v2286 = vpack.c.b16 %v2188, %v2187
        %v2287 = vpack.c.b16 %v2190, %v2189
        %v2288 = vpack.c.b16 %v2192, %v2191
        %2385 = vmatprep.subr.bf16.mxu0 0
        %2386 = vmatpush1.bf16.msra.mxu0 %v2200
        %2387 = vmatprep.subr.bf16.mxu0 0
        %2388 = vmatpush1.bf16.msra.mxu0 %v2199
        %2389 = vmatprep.subr.bf16.mxu0 0
        %2390 = vmatpush1.bf16.msra.mxu0 %v2198
        %2391 = vmatprep.subr.bf16.mxu0 0
        %2392 = vmatpush1.bf16.msra.mxu0 %v2197
        %2393 = vmatprep.subr.bf16.mxu0 0
        %2394 = vmatpush1.bf16.msra.mxu0 %v2196
        %2395 = vmatprep.subr.bf16.mxu0 0
        %2396 = vmatpush1.bf16.msra.mxu0 %v2195
        %2397 = vmatprep.subr.bf16.mxu0 0
        %2398 = vmatpush1.bf16.msra.mxu0 %v2194
        %2399 = vmatprep.subr.bf16.mxu0 0
        %2400 = vmatpush1.bf16.msra.mxu0 %v2193
        %2401 = vmatprep.subr.bf16.mxu0 0
        %2402 = vmatpush2.bf16.msra.mxu0 %v2208
        %2403 = vmatprep.subr.bf16.mxu0 0
        %2404 = vmatpush2.bf16.msra.mxu0 %v2207
        %2405 = vmatprep.subr.bf16.mxu0 0
        %2406 = vmatpush2.bf16.msra.mxu0 %v2206
        %2407 = vmatprep.subr.bf16.mxu0 0
        %2408 = vmatpush2.bf16.msra.mxu0 %v2205
        %2409 = vmatprep.subr.bf16.mxu0 0
        %2410 = vmatpush2.bf16.msra.mxu0 %v2204
        %2411 = vmatprep.subr.bf16.mxu0 0
        %2412 = vmatpush2.bf16.msra.mxu0 %v2203
        %2413 = vmatprep.subr.bf16.mxu0 0
        %2414 = vmatpush2.bf16.msra.mxu0 %v2202
        %2415 = vmatprep.subr.bf16.mxu0 0
        %2416 = vmatpush2.bf16.msra.mxu0 %v2201
        %2417 = vmatprep.mubr.bf16.mxu0 %v1588
        %2418 = vmatmul.mubr.bf16.gmra.mxu0 %v1587
        %v2419 = vpop.f32.mrf.mxu0
        %v2420 = vadd.f32 %v1807, %v2419
        %v2421 = vpop.f32.mrf.mxu0
        %v2422 = vpop.f32.mrf.mxu0
        %v2423 = vadd.f32 %v1807, %v2422
        %v2424 = vpop.f32.mrf.mxu0
        %2425 = vmatprep.mubr.bf16.mxu0 %v1600
        %2426 = vmatmul.mubr.bf16.gmra.mxu0 %v1599
        %v2427 = vpop.f32.mrf.mxu0
        %v2428 = vadd.f32 %v1807, %v2427
        %v2429 = vpop.f32.mrf.mxu0
        %v2430 = vpop.f32.mrf.mxu0
        %v2431 = vadd.f32 %v1807, %v2430
        %v2432 = vpop.f32.mrf.mxu0
        %2433 = vdwg.mxu0
        %2434 = vmatprep.subr.bf16.mxu0 0
        %2435 = vmatpush1.bf16.msra.mxu0 %v2216
        %2436 = vmatprep.subr.bf16.mxu0 0
        %2437 = vmatpush1.bf16.msra.mxu0 %v2215
        %2438 = vmatprep.subr.bf16.mxu0 0
        %2439 = vmatpush1.bf16.msra.mxu0 %v2214
        %2440 = vmatprep.subr.bf16.mxu0 0
        %2441 = vmatpush1.bf16.msra.mxu0 %v2213
        %2442 = vmatprep.subr.bf16.mxu0 0
        %2443 = vmatpush1.bf16.msra.mxu0 %v2212
        %2444 = vmatprep.subr.bf16.mxu0 0
        %2445 = vmatpush1.bf16.msra.mxu0 %v2211
        %2446 = vmatprep.subr.bf16.mxu0 0
        %2447 = vmatpush1.bf16.msra.mxu0 %v2210
        %2448 = vmatprep.subr.bf16.mxu0 0
        %2449 = vmatpush1.bf16.msra.mxu0 %v2209
        %2450 = vmatprep.subr.bf16.mxu0 0
        %2451 = vmatpush2.bf16.msra.mxu0 %v2224
        %2452 = vmatprep.subr.bf16.mxu0 0
        %2453 = vmatpush2.bf16.msra.mxu0 %v2223
        %2454 = vmatprep.subr.bf16.mxu0 0
        %2455 = vmatpush2.bf16.msra.mxu0 %v2222
        %2456 = vmatprep.subr.bf16.mxu0 0
        %2457 = vmatpush2.bf16.msra.mxu0 %v2221
        %2458 = vmatprep.subr.bf16.mxu0 0
        %2459 = vmatpush2.bf16.msra.mxu0 %v2220
        %2460 = vmatprep.subr.bf16.mxu0 0
        %2461 = vmatpush2.bf16.msra.mxu0 %v2219
        %2462 = vmatprep.subr.bf16.mxu0 0
        %2463 = vmatpush2.bf16.msra.mxu0 %v2218
        %2464 = vmatprep.subr.bf16.mxu0 0
        %2465 = vmatpush2.bf16.msra.mxu0 %v2217
        %2466 = vmatprep.mubr.bf16.mxu0 %v1590
        %2467 = vmatmul.mubr.bf16.gmra.mxu0 %v1589
        %v2468 = vpop.f32.mrf.mxu0
        %v2469 = vadd.f32 %v2420, %v2468
        %v2470 = vpop.f32.mrf.mxu0
        %v2471 = vpop.f32.mrf.mxu0
        %v2472 = vadd.f32 %v2423, %v2471
        %v2473 = vpop.f32.mrf.mxu0
        %2474 = vmatprep.mubr.bf16.mxu0 %v1602
        %2475 = vmatmul.mubr.bf16.gmra.mxu0 %v1601
        %v2476 = vpop.f32.mrf.mxu0
        %v2477 = vadd.f32 %v2428, %v2476
        %v2478 = vpop.f32.mrf.mxu0
        %v2479 = vpop.f32.mrf.mxu0
        %v2480 = vadd.f32 %v2431, %v2479
        %v2481 = vpop.f32.mrf.mxu0
        %2482 = vdwg.mxu0
        %2483 = vmatprep.subr.bf16.mxu0 0
        %2484 = vmatpush1.bf16.msra.mxu0 %v2232
        %2485 = vmatprep.subr.bf16.mxu0 0
        %2486 = vmatpush1.bf16.msra.mxu0 %v2231
        %2487 = vmatprep.subr.bf16.mxu0 0
        %2488 = vmatpush1.bf16.msra.mxu0 %v2230
        %2489 = vmatprep.subr.bf16.mxu0 0
        %2490 = vmatpush1.bf16.msra.mxu0 %v2229
        %2491 = vmatprep.subr.bf16.mxu0 0
        %2492 = vmatpush1.bf16.msra.mxu0 %v2228
        %2493 = vmatprep.subr.bf16.mxu0 0
        %2494 = vmatpush1.bf16.msra.mxu0 %v2227
        %2495 = vmatprep.subr.bf16.mxu0 0
        %2496 = vmatpush1.bf16.msra.mxu0 %v2226
        %2497 = vmatprep.subr.bf16.mxu0 0
        %2498 = vmatpush1.bf16.msra.mxu0 %v2225
        %2499 = vmatprep.subr.bf16.mxu0 0
        %2500 = vmatpush2.bf16.msra.mxu0 %v2240
        %2501 = vmatprep.subr.bf16.mxu0 0
        %2502 = vmatpush2.bf16.msra.mxu0 %v2239
        %2503 = vmatprep.subr.bf16.mxu0 0
        %2504 = vmatpush2.bf16.msra.mxu0 %v2238
        %2505 = vmatprep.subr.bf16.mxu0 0
        %2506 = vmatpush2.bf16.msra.mxu0 %v2237
        %2507 = vmatprep.subr.bf16.mxu0 0
        %2508 = vmatpush2.bf16.msra.mxu0 %v2236
        %2509 = vmatprep.subr.bf16.mxu0 0
        %2510 = vmatpush2.bf16.msra.mxu0 %v2235
        %2511 = vmatprep.subr.bf16.mxu0 0
        %2512 = vmatpush2.bf16.msra.mxu0 %v2234
        %2513 = vmatprep.subr.bf16.mxu0 0
        %2514 = vmatpush2.bf16.msra.mxu0 %v2233
        %2515 = vmatprep.mubr.bf16.mxu0 %v1592
        %2516 = vmatmul.mubr.bf16.gmra.mxu0 %v1591
        %v2517 = vpop.f32.mrf.mxu0
        %v2518 = vadd.f32 %v2469, %v2517
        %v2519 = vpop.f32.mrf.mxu0
        %v2520 = vpop.f32.mrf.mxu0
        %v2521 = vadd.f32 %v2472, %v2520
        %v2522 = vpop.f32.mrf.mxu0
        %2523 = vmatprep.mubr.bf16.mxu0 %v1604
        %2524 = vmatmul.mubr.bf16.gmra.mxu0 %v1603
        %v2525 = vpop.f32.mrf.mxu0
        %v2526 = vadd.f32 %v2477, %v2525
        %v2527 = vpop.f32.mrf.mxu0
        %v2528 = vpop.f32.mrf.mxu0
        %v2529 = vadd.f32 %v2480, %v2528
        %v2530 = vpop.f32.mrf.mxu0
        %2531 = vdwg.mxu0
        %2532 = vmatprep.subr.bf16.mxu0 0
        %2533 = vmatpush1.bf16.msra.mxu0 %v2248
        %2534 = vmatprep.subr.bf16.mxu0 0
        %2535 = vmatpush1.bf16.msra.mxu0 %v2247
        %2536 = vmatprep.subr.bf16.mxu0 0
        %2537 = vmatpush1.bf16.msra.mxu0 %v2246
        %2538 = vmatprep.subr.bf16.mxu0 0
        %2539 = vmatpush1.bf16.msra.mxu0 %v2245
        %2540 = vmatprep.subr.bf16.mxu0 0
        %2541 = vmatpush1.bf16.msra.mxu0 %v2244
        %2542 = vmatprep.subr.bf16.mxu0 0
        %2543 = vmatpush1.bf16.msra.mxu0 %v2243
        %2544 = vmatprep.subr.bf16.mxu0 0
        %2545 = vmatpush1.bf16.msra.mxu0 %v2242
        %2546 = vmatprep.subr.bf16.mxu0 0
        %2547 = vmatpush1.bf16.msra.mxu0 %v2241
        %2548 = vmatprep.subr.bf16.mxu0 0
        %2549 = vmatpush2.bf16.msra.mxu0 %v2256
        %2550 = vmatprep.subr.bf16.mxu0 0
        %2551 = vmatpush2.bf16.msra.mxu0 %v2255
        %2552 = vmatprep.subr.bf16.mxu0 0
        %2553 = vmatpush2.bf16.msra.mxu0 %v2254
        %2554 = vmatprep.subr.bf16.mxu0 0
        %2555 = vmatpush2.bf16.msra.mxu0 %v2253
        %2556 = vmatprep.subr.bf16.mxu0 0
        %2557 = vmatpush2.bf16.msra.mxu0 %v2252
        %2558 = vmatprep.subr.bf16.mxu0 0
        %2559 = vmatpush2.bf16.msra.mxu0 %v2251
        %2560 = vmatprep.subr.bf16.mxu0 0
        %2561 = vmatpush2.bf16.msra.mxu0 %v2250
        %2562 = vmatprep.subr.bf16.mxu0 0
        %2563 = vmatpush2.bf16.msra.mxu0 %v2249
        %2564 = vmatprep.mubr.bf16.mxu0 %v1594
        %2565 = vmatmul.mubr.bf16.gmra.mxu0 %v1593
        %v2566 = vpop.f32.mrf.mxu0
        %v2567 = vadd.f32 %v2518, %v2566
        %v2568 = vpop.f32.mrf.mxu0
        %v2569 = vpop.f32.mrf.mxu0
        %v2570 = vadd.f32 %v2521, %v2569
        %v2571 = vpop.f32.mrf.mxu0
        %2572 = vmatprep.mubr.bf16.mxu0 %v1606
        %2573 = vmatmul.mubr.bf16.gmra.mxu0 %v1605
        %v2574 = vpop.f32.mrf.mxu0
        %v2575 = vadd.f32 %v2526, %v2574
        %v2576 = vpop.f32.mrf.mxu0
        %v2577 = vpop.f32.mrf.mxu0
        %v2578 = vadd.f32 %v2529, %v2577
        %v2579 = vpop.f32.mrf.mxu0
        %2580 = vdwg.mxu0
        %2581 = vmatprep.subr.bf16.mxu0 0
        %2582 = vmatpush1.bf16.msra.mxu0 %v2264
        %2583 = vmatprep.subr.bf16.mxu0 0
        %2584 = vmatpush1.bf16.msra.mxu0 %v2263
        %2585 = vmatprep.subr.bf16.mxu0 0
        %2586 = vmatpush1.bf16.msra.mxu0 %v2262
        %2587 = vmatprep.subr.bf16.mxu0 0
        %2588 = vmatpush1.bf16.msra.mxu0 %v2261
        %2589 = vmatprep.subr.bf16.mxu0 0
        %2590 = vmatpush1.bf16.msra.mxu0 %v2260
        %2591 = vmatprep.subr.bf16.mxu0 0
        %2592 = vmatpush1.bf16.msra.mxu0 %v2259
        %2593 = vmatprep.subr.bf16.mxu0 0
        %2594 = vmatpush1.bf16.msra.mxu0 %v2258
        %2595 = vmatprep.subr.bf16.mxu0 0
        %2596 = vmatpush1.bf16.msra.mxu0 %v2257
        %2597 = vmatprep.subr.bf16.mxu0 0
        %2598 = vmatpush2.bf16.msra.mxu0 %v2272
        %2599 = vmatprep.subr.bf16.mxu0 0
        %2600 = vmatpush2.bf16.msra.mxu0 %v2271
        %2601 = vmatprep.subr.bf16.mxu0 0
        %2602 = vmatpush2.bf16.msra.mxu0 %v2270
        %2603 = vmatprep.subr.bf16.mxu0 0
        %2604 = vmatpush2.bf16.msra.mxu0 %v2269
        %2605 = vmatprep.subr.bf16.mxu0 0
        %2606 = vmatpush2.bf16.msra.mxu0 %v2268
        %2607 = vmatprep.subr.bf16.mxu0 0
        %2608 = vmatpush2.bf16.msra.mxu0 %v2267
        %2609 = vmatprep.subr.bf16.mxu0 0
        %2610 = vmatpush2.bf16.msra.mxu0 %v2266
        %2611 = vmatprep.subr.bf16.mxu0 0
        %2612 = vmatpush2.bf16.msra.mxu0 %v2265
        %2613 = vmatprep.mubr.bf16.mxu0 %v1596
        %2614 = vmatmul.mubr.bf16.gmra.mxu0 %v1595
        %v2615 = vpop.f32.mrf.mxu0
        %v2616 = vadd.f32 %v2567, %v2615
        %v2617 = vpop.f32.mrf.mxu0
        %v2618 = vpop.f32.mrf.mxu0
        %v2619 = vadd.f32 %v2570, %v2618
        %v2620 = vpop.f32.mrf.mxu0
        %2621 = vmatprep.mubr.bf16.mxu0 %v1608
        %2622 = vmatmul.mubr.bf16.gmra.mxu0 %v1607
        %v2623 = vpop.f32.mrf.mxu0
        %v2624 = vadd.f32 %v2575, %v2623
        %v2625 = vpop.f32.mrf.mxu0
        %v2626 = vpop.f32.mrf.mxu0
        %v2627 = vadd.f32 %v2578, %v2626
        %v2628 = vpop.f32.mrf.mxu0
        %2629 = vdwg.mxu0
        %2630 = vmatprep.subr.bf16.mxu0 0
        %2631 = vmatpush1.bf16.msra.mxu0 %v2280
        %2632 = vmatprep.subr.bf16.mxu0 0
        %2633 = vmatpush1.bf16.msra.mxu0 %v2279
        %2634 = vmatprep.subr.bf16.mxu0 0
        %2635 = vmatpush1.bf16.msra.mxu0 %v2278
        %2636 = vmatprep.subr.bf16.mxu0 0
        %2637 = vmatpush1.bf16.msra.mxu0 %v2277
        %2638 = vmatprep.subr.bf16.mxu0 0
        %2639 = vmatpush1.bf16.msra.mxu0 %v2276
        %2640 = vmatprep.subr.bf16.mxu0 0
        %2641 = vmatpush1.bf16.msra.mxu0 %v2275
        %2642 = vmatprep.subr.bf16.mxu0 0
        %2643 = vmatpush1.bf16.msra.mxu0 %v2274
        %2644 = vmatprep.subr.bf16.mxu0 0
        %2645 = vmatpush1.bf16.msra.mxu0 %v2273
        %2646 = vmatprep.subr.bf16.mxu0 0
        %2647 = vmatpush2.bf16.msra.mxu0 %v2288
        %2648 = vmatprep.subr.bf16.mxu0 0
        %2649 = vmatpush2.bf16.msra.mxu0 %v2287
        %2650 = vmatprep.subr.bf16.mxu0 0
        %2651 = vmatpush2.bf16.msra.mxu0 %v2286
        %2652 = vmatprep.subr.bf16.mxu0 0
        %2653 = vmatpush2.bf16.msra.mxu0 %v2285
        %2654 = vmatprep.subr.bf16.mxu0 0
        %2655 = vmatpush2.bf16.msra.mxu0 %v2284
        %2656 = vmatprep.subr.bf16.mxu0 0
        %2657 = vmatpush2.bf16.msra.mxu0 %v2283
        %2658 = vmatprep.subr.bf16.mxu0 0
        %2659 = vmatpush2.bf16.msra.mxu0 %v2282
        %2660 = vmatprep.subr.bf16.mxu0 0
        %2661 = vmatpush2.bf16.msra.mxu0 %v2281
        %2662 = vmatprep.mubr.bf16.mxu0 %v1598
        %2663 = vmatmul.mubr.bf16.gmra.mxu0 %v1597
        %v2664 = vpop.f32.mrf.mxu0
        %v2665 = vadd.f32 %v2616, %v2664
        %v2666 = vpop.f32.mrf.mxu0
        %v2667 = vpop.f32.mrf.mxu0
        %v2668 = vadd.f32 %v2619, %v2667
        %v2669 = vpop.f32.mrf.mxu0
        %2670 = vmatprep.mubr.bf16.mxu0 %v1610
        %2671 = vmatmul.mubr.bf16.gmra.mxu0 %v1609
        %v2672 = vpop.f32.mrf.mxu0
        %v2673 = vadd.f32 %v2624, %v2672
        %v2674 = vpop.f32.mrf.mxu0
        %v2675 = vpop.f32.mrf.mxu0
        %v2676 = vadd.f32 %v2627, %v2675
        %v2677 = vpop.f32.mrf.mxu0
        %2678 = vdwg.mxu0
        %v2679 = vmax.f32 %v2665, 0.0
        %v2680 = vmax.f32 %v2668, 0.0
        %v2681 = vmax.f32 %v2673, 0.0
        %v2682 = vmax.f32 %v2676, 0.0
        %2683 = vxpose.xlu0.b32.start [1/16] %v2679, 128
        %2684 = vxpose.xlu0.b32.cont [2/16] %v2680, 128
        %2685 = vxpose.xlu0.b32.cont [3/16] 0.0, 128
        %2686 = vxpose.xlu0.b32.cont [4/16] 0.0, 128
        %2687 = vxpose.xlu0.b32.cont [5/16] 0.0, 128
        %2688 = vxpose.xlu0.b32.cont [6/16] 0.0, 128
        %2689 = vxpose.xlu0.b32.cont [7/16] 0.0, 128
        %2690 = vxpose.xlu0.b32.cont [8/16] 0.0, 128
        %2691 = vxpose.xlu0.b32.cont [9/16] 0.0, 128
        %2692 = vxpose.xlu0.b32.cont [10/16] 0.0, 128
        %2693 = vxpose.xlu0.b32.cont [11/16] 0.0, 128
        %2694 = vxpose.xlu0.b32.cont [12/16] 0.0, 128
        %2695 = vxpose.xlu0.b32.cont [13/16] 0.0, 128
        %2696 = vxpose.xlu0.b32.cont [14/16] 0.0, 128
        %2697 = vxpose.xlu0.b32.cont [15/16] 0.0, 128
        %2698 = vxpose.xlu0.b32.end [16/16] 0.0, 128
        %v2699 = vpop.trf.xlu0
        %v2700 = vpop.trf.xlu0
        %v2701 = vpop.trf.xlu0
        %v2702 = vpop.trf.xlu0
        %v2703 = vpop.trf.xlu0
        %v2704 = vpop.trf.xlu0
        %v2705 = vpop.trf.xlu0
        %v2706 = vpop.trf.xlu0
        %v2707 = vpop.trf.xlu0
        %v2708 = vpop.trf.xlu0
        %v2709 = vpop.trf.xlu0
        %v2710 = vpop.trf.xlu0
        %v2711 = vpop.trf.xlu0
        %v2712 = vpop.trf.xlu0
        %v2713 = vpop.trf.xlu0
        %v2714 = vpop.trf.xlu0
        %2715 = vxpose.xlu0.b32.start [1/16] %v2681, 128
        %2716 = vxpose.xlu0.b32.cont [2/16] %v2682, 128
        %2717 = vxpose.xlu0.b32.cont [3/16] 0.0, 128
        %2718 = vxpose.xlu0.b32.cont [4/16] 0.0, 128
        %2719 = vxpose.xlu0.b32.cont [5/16] 0.0, 128
        %2720 = vxpose.xlu0.b32.cont [6/16] 0.0, 128
        %2721 = vxpose.xlu0.b32.cont [7/16] 0.0, 128
        %2722 = vxpose.xlu0.b32.cont [8/16] 0.0, 128
        %2723 = vxpose.xlu0.b32.cont [9/16] 0.0, 128
        %2724 = vxpose.xlu0.b32.cont [10/16] 0.0, 128
        %2725 = vxpose.xlu0.b32.cont [11/16] 0.0, 128
        %2726 = vxpose.xlu0.b32.cont [12/16] 0.0, 128
        %2727 = vxpose.xlu0.b32.cont [13/16] 0.0, 128
        %2728 = vxpose.xlu0.b32.cont [14/16] 0.0, 128
        %2729 = vxpose.xlu0.b32.cont [15/16] 0.0, 128
        %2730 = vxpose.xlu0.b32.end [16/16] 0.0, 128
        %v2731 = vpop.trf.xlu0
        %v2732 = vpop.trf.xlu0
        %v2733 = vpop.trf.xlu0
        %v2734 = vpop.trf.xlu0
        %v2735 = vpop.trf.xlu0
        %v2736 = vpop.trf.xlu0
        %v2737 = vpop.trf.xlu0
        %v2738 = vpop.trf.xlu0
        %v2739 = vpop.trf.xlu0
        %v2740 = vpop.trf.xlu0
        %v2741 = vpop.trf.xlu0
        %v2742 = vpop.trf.xlu0
        %v2743 = vpop.trf.xlu0
        %v2744 = vpop.trf.xlu0
        %v2745 = vpop.trf.xlu0
        %v2746 = vpop.trf.xlu0
        %vm2747 = vcmask 80896
        %2748 = vst.msk [vmem:[%s312] sm:$0xff] %vm2747, %v2699
        %2749 = vst.msk [vmem:[%s312 + $0x8] sm:$0xff] %vm2747, %v2700
        %2750 = vst.msk [vmem:[%s312 + $0x10] sm:$0xff] %vm2747, %v2701
        %2751 = vst.msk [vmem:[%s312 + $0x18] sm:$0xff] %vm2747, %v2702
        %2752 = vst.msk [vmem:[%s312 + $0x20] sm:$0xff] %vm2747, %v2703
        %2753 = vst.msk [vmem:[%s312 + $0x28] sm:$0xff] %vm2747, %v2704
        %2754 = vst.msk [vmem:[%s312 + $0x30] sm:$0xff] %vm2747, %v2705
        %2755 = vst.msk [vmem:[%s312 + $0x38] sm:$0xff] %vm2747, %v2706
        %2756 = vst.msk [vmem:[%s312 + $0x40] sm:$0xff] %vm2747, %v2707
        %2757 = vst.msk [vmem:[%s312 + $0x48] sm:$0xff] %vm2747, %v2708
        %2758 = vst.msk [vmem:[%s312 + $0x50] sm:$0xff] %vm2747, %v2731
        %2759 = vst.msk [vmem:[%s312 + $0x58] sm:$0xff] %vm2747, %v2732
        %2760 = vst.msk [vmem:[%s312 + $0x60] sm:$0xff] %vm2747, %v2733
        %2761 = vst.msk [vmem:[%s312 + $0x68] sm:$0xff] %vm2747, %v2734
        %2762 = vst.msk [vmem:[%s312 + $0x70] sm:$0xff] %vm2747, %v2735
        %2763 = vst.msk [vmem:[%s312 + $0x78] sm:$0xff] %vm2747, %v2736
        %2764 = vst.msk [vmem:[%s312 + $0x80] sm:$0xff] %vm2747, %v2737
        %2765 = vst.msk [vmem:[%s312 + $0x88] sm:$0xff] %vm2747, %v2738
        %2766 = vst.msk [vmem:[%s312 + $0x90] sm:$0xff] %vm2747, %v2739
        %2767 = vst.msk [vmem:[%s312 + $0x98] sm:$0xff] %vm2747, %v2740
        %s2768 = smul.u32 2, %s20
        %p2769 = scmp.lt.s32.totalorder %s2768, 3
        %s2770 = scalar_select %p2769, %s2768, 3
        %s2771 = smul.addr %s2770, 10
        %s2772 = smul.addr %s2771, 8
        %s2773 = scalar_lea.vmem %s7, %s2772
        // Predicated region
        $region57: #{tpu_custom_call.1} parent=47 // pred_check
          %p2774 = pneg %p190
        $region58: #{tpu_custom_call.1} parent=47 // pred_check_branch
          %2776 = sbr.rel (%p2774) target = $region60
        $region59: #{tpu_custom_call.1} parent=47 // pred_region
          %s2777 = smul.u32 2, %s20
        $region60: #{tpu_custom_call.1} parent=47 // pred_fallthru
          _
      $region48: #{tpu_custom_call.1} parent=5 // pred_fallthru
        _
      %p2778 = scmp.le.s32.totalorder 2, %s15
      // Predicated region
      $region61: #{tpu_custom_call.1} parent=5 // pred_check
        %p2779 = pneg %p2778
      $region62: #{tpu_custom_call.1} parent=5 // pred_check_branch
        %2781 = sbr.rel (%p2779) target = $region64
      $region63: #{tpu_custom_call.1} parent=5 // pred_region
        %s2782 = ssub.s32 %s15, 2
        // Predicated region
        $region65: #{tpu_custom_call.1} parent=63 // pred_check
          %p2783 = pneg %p196
        $region66: #{tpu_custom_call.1} parent=63 // pred_check_branch
          %2785 = sbr.rel (%p2783) target = $region68
        $region67: #{tpu_custom_call.1} parent=63 // pred_region
          %s2786 = smul.u32 2, %s21
          %p2787 = scmp.lt.s32.totalorder %s2786, 3
          %s2788 = scalar_select %p2787, %s2786, 3
          %s2789 = smul.addr %s2788, 10
          %s2790 = smul.addr %s2789, 8
          %s2791 = scalar_lea.vmem %s7, %s2790
        $region68: #{tpu_custom_call.1} parent=63 // pred_fallthru
          _
      $region64: #{tpu_custom_call.1} parent=5 // pred_fallthru
        _
    $region6: #{tpu_custom_call.1} parent=1 // loop_footer
      %s19 = sadd.s32 1, %s15
    $region7: #{tpu_custom_call.1} parent=1 // loop_footer_branch
      %14 = sbr.rel target = $region3
    $region8: #{tpu_custom_call.1} parent=1 // loop_exit
      _
    %2792 = vsyncpa [#allocation3], 1
    %s2793 = scalar_lea.sflag [#allocation3], 1
    %2794 = vsyncpa %s2793, 1
    %2795 = vsyncpa [#allocation5], 1

</llo_original>
